<compile_context>
chip_gen: v6e
topology: v6e:2x2x1
jax: 0.10.0
libtpu: 0.0.40
codegen_flags: <defaults>
</compile_context>

<pallas_src>
import math

import jax
import jax.numpy as jnp
from jax.experimental import pallas as pl
from jax.experimental.pallas import tpu as pltpu


NEG_SLOPE = 0.01                 # PyTorch F.leaky_relu default
H1_LOGICAL, H2_LOGICAL = 400, 300
SUB = 16                         # row-alignment unit (safe for bf16 (16,128) and f32 (8,128) tiling)
MAX_TILE_ROWS = 512              # batch-tile cap (>=512-row tiles reach >85% of HBM roofline)


def _cdiv(a, b):
    return -(-a // b)


def _round_up(x, m):
    return _cdiv(x, m) * m


def _hidden_pads():
    """Generation-aware padded hidden widths.

    H1 (400) always pads to 512.  H2 (300) pads to 384 on 128-wide-MXU chips
    (v4 / v5 family) and to 512 on v6e / v7x (their 256-wide MXU rounds 384 up
    to 512 internally anyway, so the extra lanes are better spent unmasked).
    """
    try:
        kind = jax.devices()[0].device_kind.lower()
    except Exception:  # pragma: no cover - defensive; padding choice is perf-only
        kind = ""
    h2_pad = 384 if ("v5" in kind or "v4" in kind) else 512
    return 512, h2_pad


def _leaky_relu(x):
    return jnp.where(x > 0, x, NEG_SLOPE * x)


def actor_kernel(s_ref, w1_ref, b1_ref, w2_ref, b2_ref, w3_ref, b3_ref, out_ref):
    # Layer 1: (TB, K_PAD) bf16 @ (K_PAD, H1_PAD) bf16 -> f32 acc -> bias -> LeakyReLU
    h1 = jnp.dot(s_ref[...], w1_ref[...], preferred_element_type=jnp.float32)
    h1 = _leaky_relu(h1 + b1_ref[...])

    # Layer 2: (TB, H1_PAD) @ (H1_PAD, H2_PAD) -> bias -> LeakyReLU
    h2 = jnp.dot(h1.astype(jnp.bfloat16), w2_ref[...],
                 preferred_element_type=jnp.float32)
    h2 = _leaky_relu(h2 + b2_ref[...])

    # Layer 3: (TB, H2_PAD) @ (H2_PAD, A_PAD) -> bias -> Tanh
    a = jnp.dot(h2.astype(jnp.bfloat16), w3_ref[...],
                preferred_element_type=jnp.float32)
    out_ref[...] = jnp.tanh(a + b3_ref[...])


def actor_forward(s, params):
    """Run the Actor forward pass as a batch-tiled Pallas kernel.

    s: (batch, state_dim) float32
    params: dict produced by init_actor_params (padded, bf16 weights).
    Returns (batch, action_dim) float32 actions in [-1, 1].
    """
    batch, state_dim = s.shape
    action_dim = params["action_dim"]
    k_pad = params["w1"].shape[0]       # padded input width (128-aligned)
    a_pad = params["w3"].shape[1]       # padded output width (128-aligned)

    # --- batch tiling -----------------------------------------------------
    # Up to MAX_TILE_ROWS rows per grid step; for batches > 256 force a
    # >= 2-step grid so multi-TensorCore chips (v7x) can shard the parallel
    # axis (weights are < 1 MiB, so replicating them into both cores is free).
    padded_rows = _round_up(batch, SUB)
    n_steps = max(1, _cdiv(padded_rows, MAX_TILE_ROWS))
    if n_steps == 1 and batch > 256:
        n_steps = 2
    tb = _round_up(_cdiv(padded_rows, n_steps), SUB)
    padded_batch = tb * n_steps

    # Pad + cast the streamed input to bf16 in one shot: halves the only
    # per-step input DMA and removes the in-kernel cast.  Padded rows/cols are
    # zero and the corresponding weight rows are zero, so the math is unchanged.
    s_padded = jnp.pad(s.astype(jnp.bfloat16),
                       ((0, padded_batch - batch), (0, k_pad - state_dim)))

    def const_spec(arr):
        # Constant block index -> loaded once, stays VMEM-resident over the grid.
        return pl.BlockSpec(arr.shape, lambda i: (0,) * arr.ndim)

    out_padded = pl.pallas_call(
        actor_kernel,
        out_shape=jax.ShapeDtypeStruct((padded_batch, a_pad), jnp.float32),
        grid_spec=pltpu.PrefetchScalarGridSpec(
            num_scalar_prefetch=0,
            grid=(n_steps,),
            in_specs=[
                pl.BlockSpec((tb, k_pad), lambda i: (i, 0)),   # streamed activations (bf16)
                const_spec(params["w1"]),
                const_spec(params["b1"]),
                const_spec(params["w2"]),
                const_spec(params["b2"]),
                const_spec(params["w3"]),
                const_spec(params["b3"]),
            ],
            out_specs=pl.BlockSpec((tb, a_pad), lambda i: (i, 0)),
        ),
        compiler_params=pltpu.CompilerParams(
            dimension_semantics=("parallel",)),
    )(s_padded, params["w1"], params["b1"], params["w2"], params["b2"],
      params["w3"], params["b3"])

    return out_padded[:batch, :action_dim]


def init_actor_params(key, state_dim, action_dim):
    """Initialization matching the PyTorch module, stored padded + transposed.

    layer_1 / layer_2 weights: torch.nn.init.kaiming_uniform_(w,
      nonlinearity='leaky_relu') with default a=0 -> gain=sqrt(2),
      bound = sqrt(6 / fan_in).
    layer_3 weight and all biases: nn.Linear default
      U(-1/sqrt(fan_in), 1/sqrt(fan_in)).
    Weights are stored as (in_features, out_features), zero-padded to
    lane/MXU-aligned shapes, and cast to bfloat16.  Biases stay float32.
    """
    h1_pad, h2_pad = _hidden_pads()
    k_pad = _round_up(state_dim, 128)
    a_pad = _round_up(action_dim, 128)

    kw1, kw2, kw3, kb1, kb2, kb3 = jax.random.split(key, 6)

    def kaiming_uniform_leaky(k, fan_in, fan_out):
        bound = math.sqrt(6.0 / fan_in)
        return jax.random.uniform(k, (fan_in, fan_out), jnp.float32, -bound, bound)

    def linear_default(k, fan_in, shape):
        bound = 1.0 / math.sqrt(fan_in)
        return jax.random.uniform(k, shape, jnp.float32, -bound, bound)

    def pad2(x, shape):
        out = jnp.zeros(shape, x.dtype)
        return out.at[:x.shape[0], :x.shape[1]].set(x)

    w1 = pad2(kaiming_uniform_leaky(kw1, state_dim, H1_LOGICAL), (k_pad, h1_pad))
    b1 = pad2(linear_default(kb1, state_dim, (1, H1_LOGICAL)), (1, h1_pad))
    w2 = pad2(kaiming_uniform_leaky(kw2, H1_LOGICAL, H2_LOGICAL), (h1_pad, h2_pad))
    b2 = pad2(linear_default(kb2, H1_LOGICAL, (1, H2_LOGICAL)), (1, h2_pad))
    w3 = pad2(linear_default(kw3, H2_LOGICAL, (H2_LOGICAL, action_dim)), (h2_pad, a_pad))
    b3 = pad2(linear_default(kb3, H2_LOGICAL, (1, action_dim)), (1, a_pad))

    return {
        "w1": w1.astype(jnp.bfloat16), "b1": b1,
        "w2": w2.astype(jnp.bfloat16), "b2": b2,
        "w3": w3.astype(jnp.bfloat16), "b3": b3,
        "state_dim": state_dim, "action_dim": action_dim,
    }


def actor_reference(s, params):
    """Pure-JAX reference using the same bf16-weight / f32-accumulate recipe."""
    state_dim = params["state_dim"]
    action_dim = params["action_dim"]
    k_pad = params["w1"].shape[0]

    x = jnp.pad(s.astype(jnp.bfloat16), ((0, 0), (0, k_pad - state_dim)))

    h1 = _leaky_relu(jnp.dot(x, params["w1"],
                             preferred_element_type=jnp.float32) + params["b1"])
    h2 = _leaky_relu(jnp.dot(h1.astype(jnp.bfloat16), params["w2"],
                             preferred_element_type=jnp.float32) + params["b2"])
    a = jnp.tanh(jnp.dot(h2.astype(jnp.bfloat16), params["w3"],
                         preferred_element_type=jnp.float32) + params["b3"])
    return a[:, :action_dim]


if __name__ == "__main__":
    key = jax.random.PRNGKey(0)
    k_params, k_state = jax.random.split(key)

    batch = 2
    state_dim = 24   # e.g. laser scan bins + goal/velocity features
    action_dim = 2   # (linear velocity, angular velocity)

    params = init_actor_params(k_params, state_dim, action_dim)
    s = jax.random.normal(k_state, (batch, state_dim), jnp.float32)

    out = actor_forward(s, params)
    out = jax.block_until_ready(out)

    ref = actor_reference(s, params)
    assert out.shape == (batch, action_dim)
    assert bool(jnp.all(jnp.abs(out) <= 1.0 + 1e-6)), "tanh bound violated"
    assert jnp.allclose(out, ref, atol=1e-4, rtol=1e-4), "mismatch vs reference"

    print("KERNEL_OK")
</pallas_src>

<mosaic_0001>
module attributes {stable_mosaic.version = 11 : i64} {
  func.func @actor_kernel(%arg0: i32, %arg1: memref<16x128xbf16, #tpu.memory_space<vmem>>, %arg2: memref<128x512xbf16, #tpu.memory_space<vmem>>, %arg3: memref<1x512xf32, #tpu.memory_space<vmem>>, %arg4: memref<512x512xbf16, #tpu.memory_space<vmem>>, %arg5: memref<1x512xf32, #tpu.memory_space<vmem>>, %arg6: memref<512x128xbf16, #tpu.memory_space<vmem>>, %arg7: memref<1x128xf32, #tpu.memory_space<vmem>>, %arg8: memref<16x128xf32, #tpu.memory_space<vmem>>) attributes {dimension_semantics = [#tpu.dimension_semantics<parallel>], iteration_bounds = array<i64: 1>, scalar_prefetch = 0 : i64, scratch_operands = 0 : i64, tpu.core_type = #tpu.core_type<tc>, window_params = [{transform_indices = @transform_0, window_bounds = array<i64: 16, 128>}, {pipeline_mode = #tpu.pipeline_mode<synchronous>, transform_indices = @transform_1, window_bounds = array<i64: 128, 512>}, {pipeline_mode = #tpu.pipeline_mode<synchronous>, transform_indices = @transform_2, window_bounds = array<i64: 1, 512>}, {pipeline_mode = #tpu.pipeline_mode<synchronous>, transform_indices = @transform_3, window_bounds = array<i64: 512, 512>}, {pipeline_mode = #tpu.pipeline_mode<synchronous>, transform_indices = @transform_4, window_bounds = array<i64: 1, 512>}, {pipeline_mode = #tpu.pipeline_mode<synchronous>, transform_indices = @transform_5, window_bounds = array<i64: 512, 128>}, {pipeline_mode = #tpu.pipeline_mode<synchronous>, transform_indices = @transform_6, window_bounds = array<i64: 1, 128>}, {transform_indices = @transform_7, window_bounds = array<i64: 16, 128>}]} {
    %c0 = arith.constant 0 : index
    %c0_0 = arith.constant 0 : index
    %0 = vector.load %arg1[%c0, %c0_0] : memref<16x128xbf16, #tpu.memory_space<vmem>>, vector<16x128xbf16>
    %c0_1 = arith.constant 0 : index
    %c0_2 = arith.constant 0 : index
    %1 = vector.load %arg2[%c0_1, %c0_2] : memref<128x512xbf16, #tpu.memory_space<vmem>>, vector<128x512xbf16>
    %cst = arith.constant dense<0.000000e+00> : vector<16x512xf32>
    %2 = tpu.matmul %0, %1, %cst {dimension_numbers = #tpu.dot_dimension_numbers<[1], [0], [0], [1], [0, 0, 1, 1], [], []>} : vector<16x128xbf16>, vector<128x512xbf16>, vector<16x512xf32> -> vector<16x512xf32>
    %c0_3 = arith.constant 0 : index
    %c0_4 = arith.constant 0 : index
    %3 = vector.load %arg3[%c0_3, %c0_4] : memref<1x512xf32, #tpu.memory_space<vmem>>, vector<1x512xf32>
    %4 = vector.broadcast %3 : vector<1x512xf32> to vector<16x512xf32>
    %5 = arith.addf %2, %4 : vector<16x512xf32>
    %cst_5 = arith.constant 0.000000e+00 : f32
    %6 = vector.broadcast %cst_5 : f32 to vector<16x512xf32>
    %7 = arith.cmpf ogt, %5, %6 : vector<16x512xf32>
    %cst_6 = arith.constant 0.00999999977 : f32
    %8 = vector.broadcast %cst_6 : f32 to vector<16x512xf32>
    %9 = arith.mulf %8, %5 : vector<16x512xf32>
    %10 = arith.select %7, %5, %9 : vector<16x512xi1>, vector<16x512xf32>
    %11 = arith.truncf %10 : vector<16x512xf32> to vector<16x512xbf16>
    %c0_7 = arith.constant 0 : index
    %c0_8 = arith.constant 0 : index
    %12 = vector.load %arg4[%c0_7, %c0_8] : memref<512x512xbf16, #tpu.memory_space<vmem>>, vector<512x512xbf16>
    %cst_9 = arith.constant dense<0.000000e+00> : vector<16x512xf32>
    %13 = tpu.matmul %11, %12, %cst_9 {dimension_numbers = #tpu.dot_dimension_numbers<[1], [0], [0], [1], [0, 0, 1, 1], [], []>} : vector<16x512xbf16>, vector<512x512xbf16>, vector<16x512xf32> -> vector<16x512xf32>
    %c0_10 = arith.constant 0 : index
    %c0_11 = arith.constant 0 : index
    %14 = vector.load %arg5[%c0_10, %c0_11] : memref<1x512xf32, #tpu.memory_space<vmem>>, vector<1x512xf32>
    %15 = vector.broadcast %14 : vector<1x512xf32> to vector<16x512xf32>
    %16 = arith.addf %13, %15 : vector<16x512xf32>
    %cst_12 = arith.constant 0.000000e+00 : f32
    %17 = vector.broadcast %cst_12 : f32 to vector<16x512xf32>
    %18 = arith.cmpf ogt, %16, %17 : vector<16x512xf32>
    %cst_13 = arith.constant 0.00999999977 : f32
    %19 = vector.broadcast %cst_13 : f32 to vector<16x512xf32>
    %20 = arith.mulf %19, %16 : vector<16x512xf32>
    %21 = arith.select %18, %16, %20 : vector<16x512xi1>, vector<16x512xf32>
    %22 = arith.truncf %21 : vector<16x512xf32> to vector<16x512xbf16>
    %c0_14 = arith.constant 0 : index
    %c0_15 = arith.constant 0 : index
    %23 = vector.load %arg6[%c0_14, %c0_15] : memref<512x128xbf16, #tpu.memory_space<vmem>>, vector<512x128xbf16>
    %cst_16 = arith.constant dense<0.000000e+00> : vector<16x128xf32>
    %24 = tpu.matmul %22, %23, %cst_16 {dimension_numbers = #tpu.dot_dimension_numbers<[1], [0], [0], [1], [0, 0, 1, 1], [], []>} : vector<16x512xbf16>, vector<512x128xbf16>, vector<16x128xf32> -> vector<16x128xf32>
    %c0_17 = arith.constant 0 : index
    %c0_18 = arith.constant 0 : index
    %25 = vector.load %arg7[%c0_17, %c0_18] : memref<1x128xf32, #tpu.memory_space<vmem>>, vector<1x128xf32>
    %26 = vector.broadcast %25 : vector<1x128xf32> to vector<16x128xf32>
    %27 = arith.addf %24, %26 : vector<16x128xf32>
    %28 = math.tanh %27 : vector<16x128xf32>
    %c0_19 = arith.constant 0 : index
    %c0_20 = arith.constant 0 : index
    %29 = vector.load %arg8[%c0_19, %c0_20] : memref<16x128xf32, #tpu.memory_space<vmem>>, vector<16x128xf32>
    tpu.vector_store %arg8[%c0_19, %c0_20], %28 {strides = array<i32>} : memref<16x128xf32, #tpu.memory_space<vmem>>, vector<16x128xf32>,
    return
  }
  func.func @transform_0(%arg0: i32) -> (i32, i32) {
    %c0_i32 = arith.constant 0 : i32
    %c0_i32_0 = arith.constant 0 : i32
    return %arg0, %c0_i32 : i32, i32
  }
  func.func @transform_1(%arg0: i32) -> (i32, i32) {
    %c0_i32 = arith.constant 0 : i32
    %c0_i32_0 = arith.constant 0 : i32
    %c0_i32_1 = arith.constant 0 : i32
    return %c0_i32, %c0_i32_0 : i32, i32
  }
  func.func @transform_2(%arg0: i32) -> (i32, i32) {
    %c0_i32 = arith.constant 0 : i32
    %c0_i32_0 = arith.constant 0 : i32
    %c0_i32_1 = arith.constant 0 : i32
    return %c0_i32, %c0_i32_0 : i32, i32
  }
  func.func @transform_3(%arg0: i32) -> (i32, i32) {
    %c0_i32 = arith.constant 0 : i32
    %c0_i32_0 = arith.constant 0 : i32
    %c0_i32_1 = arith.constant 0 : i32
    return %c0_i32, %c0_i32_0 : i32, i32
  }
  func.func @transform_4(%arg0: i32) -> (i32, i32) {
    %c0_i32 = arith.constant 0 : i32
    %c0_i32_0 = arith.constant 0 : i32
    %c0_i32_1 = arith.constant 0 : i32
    return %c0_i32, %c0_i32_0 : i32, i32
  }
  func.func @transform_5(%arg0: i32) -> (i32, i32) {
    %c0_i32 = arith.constant 0 : i32
    %c0_i32_0 = arith.constant 0 : i32
    %c0_i32_1 = arith.constant 0 : i32
    return %c0_i32, %c0_i32_0 : i32, i32
  }
  func.func @transform_6(%arg0: i32) -> (i32, i32) {
    %c0_i32 = arith.constant 0 : i32
    %c0_i32_0 = arith.constant 0 : i32
    %c0_i32_1 = arith.constant 0 : i32
    return %c0_i32, %c0_i32_0 : i32, i32
  }
  func.func @transform_7(%arg0: i32) -> (i32, i32) {
    %c0_i32 = arith.constant 0 : i32
    %c0_i32_0 = arith.constant 0 : i32
    return %arg0, %c0_i32 : i32, i32
  }
}

</mosaic_0001>

<llo_original>
// kernel: tpu_custom_call.1
$region0: #{tpu_custom_call.1}
  #allocation0 [shape = 'u32[]', space=smem, size = 0x4, offset = 0x4, fixed_abs, tag = 'smem constant byte address 0x4 - core index']
  #allocation1 [shape = 'u32[144,128]{1,0:T(1,128)}', space=vmem, size = 0x12000, scoped, tag = 'internal scratch']
  %s0 = inlined_call_operand.hbm [shape: bf16[16,128], index: 0, kind: input, shape index: {}]
  %s1 = inlined_call_operand.hbm [shape: bf16[128,512], index: 1, kind: input, shape index: {}]
  %s2 = inlined_call_operand.hbm [shape: f32[1,512], index: 2, kind: input, shape index: {}]
  %s3 = inlined_call_operand.hbm [shape: bf16[512,512], index: 3, kind: input, shape index: {}]
  %s4 = inlined_call_operand.vmem [shape: f32[1,512], index: 4, kind: input, shape index: {}]
  %s5 = inlined_call_operand.hbm [shape: bf16[512,128], index: 5, kind: input, shape index: {}]
  %s6 = inlined_call_operand.vmem [shape: f32[1,128], index: 6, kind: input, shape index: {}]
  %s7 = inlined_call_operand.hbm [shape: f32[16,128], index: 7, kind: output, shape index: {}]
  %s8 = sld [smem:[#allocation0]]
  $region58: #{tpu_custom_call.1} parent=0
    _
  %s10 = ssub.s32 1, %s8
  %s11 = scalar_select 0, %s10, %s8
  $region1: #{tpu_custom_call.1} parent=0
    #allocation2 [shape = 'u8[4096]{0}', space=vmem, size = 0x1000, scoped, tag = 'input window, operand 0, single buffered']
    #allocation3 [shape = 's32[1]{0}', space=sflag, size = 0x4, scoped, tag = 'scoped memory for tpu_custom_call.1']
    #allocation4 [shape = 's32[1]{0}', space=sflag, size = 0x4, scoped, tag = 'scoped memory for tpu_custom_call.1']
    #allocation5 [shape = 'u8[131072]{0}', space=vmem, size = 0x20000, scoped, tag = 'input window, operand 1, single buffered']
    #allocation6 [shape = 's32[1]{0}', space=sflag, size = 0x4, scoped, tag = 'scoped memory for tpu_custom_call.1']
    #allocation7 [shape = 'u8[2048]{0}', space=vmem, size = 0x800, scoped, tag = 'input window, operand 2, single buffered']
    #allocation8 [shape = 'u8[524288]{0}', space=vmem, size = 0x80000, scoped, tag = 'input window, operand 3, single buffered']
    #allocation9 [shape = 's32[1]{0}', space=sflag, size = 0x4, scoped, tag = 'scoped memory for tpu_custom_call.1']
    #allocation10 [shape = 'u8[131072]{0}', space=vmem, size = 0x20000, scoped, tag = 'input window, operand 5, single buffered']
    #allocation11 [shape = 'u8[8192]{0}', space=vmem, size = 0x2000, scoped, tag = 'output window, operand 0, single buffered']
    %12 = vsyncpa [#allocation3], 0
    %13 = vsyncpa [#allocation6], 0
    %14 = vsyncpa [#allocation9], 0
    %15 = vsyncpa [#allocation4], 0
    // Predicated region
    $region2: #{tpu_custom_call.1} parent=1 // pred_check
      _
    $region3: #{tpu_custom_call.1} parent=1 // pred_check_branch
      %17 = sbr.rel (0) target = $region5
    $region4: #{tpu_custom_call.1} parent=1 // pred_region
      %s19 = ssub.s32 128, 128
      %20 = vsyncadd [#allocation3], %s19
      %s21 = sshll.u32 [#allocation2], 4
      %s22 = int_to_ptr.vmem [resolvable:$true] %s21
      %27 = dma.hbm_to_vmem [thread:$0]  %s0, 128, %s22, [#allocation3], 64, 64, 4
    $region5: #{tpu_custom_call.1} parent=1 // pred_fallthru
      _
    // Predicated region
    $region6: #{tpu_custom_call.1} parent=1 // pred_check
      _
    $region7: #{tpu_custom_call.1} parent=1 // pred_check_branch
      %29 = sbr.rel (0) target = $region9
    $region8: #{tpu_custom_call.1} parent=1 // pred_region
      %s31 = ssub.s32 4096, 4096
      %32 = vsyncadd [#allocation6], %s31
      %s33 = sshll.u32 [#allocation5], 4
      %s34 = int_to_ptr.vmem [resolvable:$true] %s33
      %39 = dma.hbm_to_vmem [thread:$0]  %s1, 4096, %s34, [#allocation6], 256, 256, 16
    $region9: #{tpu_custom_call.1} parent=1 // pred_fallthru
      _
    // Predicated region
    $region10: #{tpu_custom_call.1} parent=1 // pred_check
      _
    $region11: #{tpu_custom_call.1} parent=1 // pred_check_branch
      %41 = sbr.rel (0) target = $region13
    $region12: #{tpu_custom_call.1} parent=1 // pred_region
      %s43 = ssub.s32 64, 64
      %44 = vsyncadd [#allocation6], %s43
      %s46 = sshll.u32 [#allocation7], 4
      %s47 = int_to_ptr.vmem [resolvable:$true] %s46
      %49 = dma.hbm_to_vmem [thread:$0]  %s2, 64, %s47, [#allocation6]
    $region13: #{tpu_custom_call.1} parent=1 // pred_fallthru
      _
    // Predicated region
    $region14: #{tpu_custom_call.1} parent=1 // pred_check
      _
    $region15: #{tpu_custom_call.1} parent=1 // pred_check_branch
      %51 = sbr.rel (0) target = $region17
    $region16: #{tpu_custom_call.1} parent=1 // pred_region
      %s53 = ssub.s32 16384, 16384
      %54 = vsyncadd [#allocation9], %s53
      %s55 = sshll.u32 [#allocation8], 4
      %s56 = int_to_ptr.vmem [resolvable:$true] %s55
      %61 = dma.hbm_to_vmem [thread:$0]  %s3, 16384, %s56, [#allocation9], 256, 256, 16
    $region17: #{tpu_custom_call.1} parent=1 // pred_fallthru
      _
    // Predicated region
    $region18: #{tpu_custom_call.1} parent=1 // pred_check
      _
    $region19: #{tpu_custom_call.1} parent=1 // pred_check_branch
      %63 = sbr.rel (0) target = $region21
    $region20: #{tpu_custom_call.1} parent=1 // pred_region
      _
    $region21: #{tpu_custom_call.1} parent=1 // pred_fallthru
      _
    // Predicated region
    $region22: #{tpu_custom_call.1} parent=1 // pred_check
      _
    $region23: #{tpu_custom_call.1} parent=1 // pred_check_branch
      %65 = sbr.rel (0) target = $region25
    $region24: #{tpu_custom_call.1} parent=1 // pred_region
      %s67 = ssub.s32 4096, 4096
      %68 = vsyncadd [#allocation9], %s67
      %s69 = sshll.u32 [#allocation10], 4
      %s70 = int_to_ptr.vmem [resolvable:$true] %s69
      %75 = dma.hbm_to_vmem [thread:$0]  %s5, 4096, %s70, [#allocation9], 64, 64, 4
    $region25: #{tpu_custom_call.1} parent=1 // pred_fallthru
      _
    // Predicated region
    $region26: #{tpu_custom_call.1} parent=1 // pred_check
      _
    $region27: #{tpu_custom_call.1} parent=1 // pred_check_branch
      %77 = sbr.rel (0) target = $region29
    $region28: #{tpu_custom_call.1} parent=1 // pred_region
      _
    $region29: #{tpu_custom_call.1} parent=1 // pred_fallthru
      _
    // Predicated region
    $region30: #{tpu_custom_call.1} parent=1 // pred_check
      _
    $region31: #{tpu_custom_call.1} parent=1 // pred_check_branch
      %79 = sbr.rel (0) target = $region33
    $region32: #{tpu_custom_call.1} parent=1 // pred_region
      %80 = dma.done [#allocation3], 128
    $region33: #{tpu_custom_call.1} parent=1 // pred_fallthru
      _
    // Predicated region
    $region34: #{tpu_custom_call.1} parent=1 // pred_check
      _
    $region35: #{tpu_custom_call.1} parent=1 // pred_check_branch
      %82 = sbr.rel (0) target = $region37
    $region36: #{tpu_custom_call.1} parent=1 // pred_region
      %83 = dma.done [#allocation6], 4096
    $region37: #{tpu_custom_call.1} parent=1 // pred_fallthru
      _
    // Predicated region
    $region38: #{tpu_custom_call.1} parent=1 // pred_check
      _
    $region39: #{tpu_custom_call.1} parent=1 // pred_check_branch
      %85 = sbr.rel (0) target = $region41
    $region40: #{tpu_custom_call.1} parent=1 // pred_region
      %86 = dma.done [#allocation6], 64
    $region41: #{tpu_custom_call.1} parent=1 // pred_fallthru
      _
    // Predicated region
    $region42: #{tpu_custom_call.1} parent=1 // pred_check
      _
    $region43: #{tpu_custom_call.1} parent=1 // pred_check_branch
      %88 = sbr.rel (0) target = $region45
    $region44: #{tpu_custom_call.1} parent=1 // pred_region
      %89 = dma.done [#allocation9], 16384
    $region45: #{tpu_custom_call.1} parent=1 // pred_fallthru
      _
    // Predicated region
    $region46: #{tpu_custom_call.1} parent=1 // pred_check
      _
    $region47: #{tpu_custom_call.1} parent=1 // pred_check_branch
      %91 = sbr.rel (0) target = $region49
    $region48: #{tpu_custom_call.1} parent=1 // pred_region
      %92 = dma.done [#allocation9], 4096
    $region49: #{tpu_custom_call.1} parent=1 // pred_fallthru
      _
    %v94 = vld [vmem:[#allocation2] sm:$0xf]
    %v95 = vld [vmem:[#allocation2 + $0x4] sm:$0xf]
    %v96 = vld [vmem:[#allocation5] sm:$0xff]
    %v97 = vld [vmem:[#allocation5 + $0x8] sm:$0xff]
    %v98 = vld [vmem:[#allocation5 + $0x10] sm:$0xff]
    %v99 = vld [vmem:[#allocation5 + $0x18] sm:$0xff]
    %v100 = vld [vmem:[#allocation5 + $0x20] sm:$0xff]
    %v101 = vld [vmem:[#allocation5 + $0x28] sm:$0xff]
    %v102 = vld [vmem:[#allocation5 + $0x30] sm:$0xff]
    %v103 = vld [vmem:[#allocation5 + $0x38] sm:$0xff]
    %v104 = vld [vmem:[#allocation5 + $0x40] sm:$0xff]
    %v105 = vld [vmem:[#allocation5 + $0x48] sm:$0xff]
    %v106 = vld [vmem:[#allocation5 + $0x50] sm:$0xff]
    %v107 = vld [vmem:[#allocation5 + $0x58] sm:$0xff]
    %v108 = vld [vmem:[#allocation5 + $0x60] sm:$0xff]
    %v109 = vld [vmem:[#allocation5 + $0x68] sm:$0xff]
    %v110 = vld [vmem:[#allocation5 + $0x70] sm:$0xff]
    %v111 = vld [vmem:[#allocation5 + $0x78] sm:$0xff]
    %v112 = vld [vmem:[#allocation5 + $0x80] sm:$0xff]
    %v113 = vld [vmem:[#allocation5 + $0x88] sm:$0xff]
    %v114 = vld [vmem:[#allocation5 + $0x90] sm:$0xff]
    %v115 = vld [vmem:[#allocation5 + $0x98] sm:$0xff]
    %v116 = vld [vmem:[#allocation5 + $0xa0] sm:$0xff]
    %v117 = vld [vmem:[#allocation5 + $0xa8] sm:$0xff]
    %v118 = vld [vmem:[#allocation5 + $0xb0] sm:$0xff]
    %v119 = vld [vmem:[#allocation5 + $0xb8] sm:$0xff]
    %v120 = vld [vmem:[#allocation5 + $0xc0] sm:$0xff]
    %v121 = vld [vmem:[#allocation5 + $0xc8] sm:$0xff]
    %v122 = vld [vmem:[#allocation5 + $0xd0] sm:$0xff]
    %v123 = vld [vmem:[#allocation5 + $0xd8] sm:$0xff]
    %v124 = vld [vmem:[#allocation5 + $0xe0] sm:$0xff]
    %v125 = vld [vmem:[#allocation5 + $0xe8] sm:$0xff]
    %v126 = vld [vmem:[#allocation5 + $0xf0] sm:$0xff]
    %v127 = vld [vmem:[#allocation5 + $0xf8] sm:$0xff]
    %v128 = vld [vmem:[#allocation7] sm:$0xf]
    %v130 = vlaneseq
    %v131 = vshrl.u32 %v130, 7
    %v132 = vsub.s32 0, %v131
    %v133 = vrot.slane %v128, %v132
    %v134 = vlaneseq
    %v135 = vshrl.u32 %v134, 7
    %v136 = vsub.s32 1, %v135
    %v137 = vrot.slane %v128, %v136
    %v138 = vlaneseq
    %v139 = vshrl.u32 %v138, 7
    %v140 = vsub.s32 2, %v139
    %v141 = vrot.slane %v128, %v140
    %v142 = vlaneseq
    %v143 = vshrl.u32 %v142, 7
    %v144 = vsub.s32 3, %v143
    %v145 = vrot.slane %v128, %v144
    %v152 = vunpack.c.l.b16 %v94
    %v153 = vunpack.c.l.b16 %v95
    %v154 = vpack.c.b16 %v153, %v152
    %v188 = vunpack.c.l.b16 %v96
    %v189 = vunpack.c.h.b16 %v96
    %v190 = vunpack.c.l.b16 %v97
    %v191 = vunpack.c.h.b16 %v97
    %v192 = vunpack.c.l.b16 %v98
    %v193 = vunpack.c.h.b16 %v98
    %v194 = vunpack.c.l.b16 %v99
    %v195 = vunpack.c.h.b16 %v99
    %v196 = vunpack.c.l.b16 %v100
    %v197 = vunpack.c.h.b16 %v100
    %v198 = vunpack.c.l.b16 %v101
    %v199 = vunpack.c.h.b16 %v101
    %v200 = vunpack.c.l.b16 %v102
    %v201 = vunpack.c.h.b16 %v102
    %v202 = vunpack.c.l.b16 %v103
    %v203 = vunpack.c.h.b16 %v103
    %v204 = vunpack.c.l.b16 %v104
    %v205 = vunpack.c.h.b16 %v104
    %v206 = vunpack.c.l.b16 %v105
    %v207 = vunpack.c.h.b16 %v105
    %v208 = vunpack.c.l.b16 %v106
    %v209 = vunpack.c.h.b16 %v106
    %v210 = vunpack.c.l.b16 %v107
    %v211 = vunpack.c.h.b16 %v107
    %v212 = vunpack.c.l.b16 %v108
    %v213 = vunpack.c.h.b16 %v108
    %v214 = vunpack.c.l.b16 %v109
    %v215 = vunpack.c.h.b16 %v109
    %v216 = vunpack.c.l.b16 %v110
    %v217 = vunpack.c.h.b16 %v110
    %v218 = vunpack.c.l.b16 %v111
    %v219 = vunpack.c.h.b16 %v111
    %v220 = vunpack.c.l.b16 %v112
    %v221 = vunpack.c.h.b16 %v112
    %v222 = vunpack.c.l.b16 %v113
    %v223 = vunpack.c.h.b16 %v113
    %v224 = vunpack.c.l.b16 %v114
    %v225 = vunpack.c.h.b16 %v114
    %v226 = vunpack.c.l.b16 %v115
    %v227 = vunpack.c.h.b16 %v115
    %v228 = vunpack.c.l.b16 %v116
    %v229 = vunpack.c.h.b16 %v116
    %v230 = vunpack.c.l.b16 %v117
    %v231 = vunpack.c.h.b16 %v117
    %v232 = vunpack.c.l.b16 %v118
    %v233 = vunpack.c.h.b16 %v118
    %v234 = vunpack.c.l.b16 %v119
    %v235 = vunpack.c.h.b16 %v119
    %v236 = vunpack.c.l.b16 %v120
    %v237 = vunpack.c.h.b16 %v120
    %v238 = vunpack.c.l.b16 %v121
    %v239 = vunpack.c.h.b16 %v121
    %v240 = vunpack.c.l.b16 %v122
    %v241 = vunpack.c.h.b16 %v122
    %v242 = vunpack.c.l.b16 %v123
    %v243 = vunpack.c.h.b16 %v123
    %v244 = vunpack.c.l.b16 %v124
    %v245 = vunpack.c.h.b16 %v124
    %v246 = vunpack.c.l.b16 %v125
    %v247 = vunpack.c.h.b16 %v125
    %v248 = vunpack.c.l.b16 %v126
    %v249 = vunpack.c.h.b16 %v126
    %v250 = vunpack.c.l.b16 %v127
    %v251 = vunpack.c.h.b16 %v127
    %v252 = vpack.c.b16 %v192, %v188
    %v253 = vpack.c.b16 %v193, %v189
    %v254 = vpack.c.b16 %v194, %v190
    %v255 = vpack.c.b16 %v195, %v191
    %v256 = vpack.c.b16 %v200, %v196
    %v257 = vpack.c.b16 %v201, %v197
    %v258 = vpack.c.b16 %v202, %v198
    %v259 = vpack.c.b16 %v203, %v199
    %v260 = vpack.c.b16 %v208, %v204
    %v261 = vpack.c.b16 %v209, %v205
    %v262 = vpack.c.b16 %v210, %v206
    %v263 = vpack.c.b16 %v211, %v207
    %v264 = vpack.c.b16 %v216, %v212
    %v265 = vpack.c.b16 %v217, %v213
    %v266 = vpack.c.b16 %v218, %v214
    %v267 = vpack.c.b16 %v219, %v215
    %v268 = vpack.c.b16 %v224, %v220
    %v269 = vpack.c.b16 %v225, %v221
    %v270 = vpack.c.b16 %v226, %v222
    %v271 = vpack.c.b16 %v227, %v223
    %v272 = vpack.c.b16 %v232, %v228
    %v273 = vpack.c.b16 %v233, %v229
    %v274 = vpack.c.b16 %v234, %v230
    %v275 = vpack.c.b16 %v235, %v231
    %v276 = vpack.c.b16 %v240, %v236
    %v277 = vpack.c.b16 %v241, %v237
    %v278 = vpack.c.b16 %v242, %v238
    %v279 = vpack.c.b16 %v243, %v239
    %v280 = vpack.c.b16 %v248, %v244
    %v281 = vpack.c.b16 %v249, %v245
    %v282 = vpack.c.b16 %v250, %v246
    %v283 = vpack.c.b16 %v251, %v247
    %316 = vmatprep.subr.bf16.mxu0 %v281
    %317 = vmatpush1.bf16.msra.mxu0 %v280
    %318 = vmatprep.subr.bf16.mxu0 %v277
    %319 = vmatpush1.bf16.msra.mxu0 %v276
    %320 = vmatprep.subr.bf16.mxu0 %v273
    %321 = vmatpush1.bf16.msra.mxu0 %v272
    %322 = vmatprep.subr.bf16.mxu0 %v269
    %323 = vmatpush1.bf16.msra.mxu0 %v268
    %324 = vmatprep.subr.bf16.mxu0 %v265
    %325 = vmatpush1.bf16.msra.mxu0 %v264
    %326 = vmatprep.subr.bf16.mxu0 %v261
    %327 = vmatpush1.bf16.msra.mxu0 %v260
    %328 = vmatprep.subr.bf16.mxu0 %v257
    %329 = vmatpush1.bf16.msra.mxu0 %v256
    %330 = vmatprep.subr.bf16.mxu0 %v253
    %331 = vmatpush1.bf16.msra.mxu0 %v252
    %332 = vmatprep.subr.bf16.mxu0 0
    %333 = vmatpush2.bf16.msra.mxu0 0
    %334 = vmatprep.subr.bf16.mxu0 0
    %335 = vmatpush2.bf16.msra.mxu0 0
    %336 = vmatprep.subr.bf16.mxu0 0
    %337 = vmatpush2.bf16.msra.mxu0 0
    %338 = vmatprep.subr.bf16.mxu0 0
    %339 = vmatpush2.bf16.msra.mxu0 0
    %340 = vmatprep.subr.bf16.mxu0 0
    %341 = vmatpush2.bf16.msra.mxu0 0
    %342 = vmatprep.subr.bf16.mxu0 0
    %343 = vmatpush2.bf16.msra.mxu0 0
    %344 = vmatprep.subr.bf16.mxu0 0
    %345 = vmatpush2.bf16.msra.mxu0 0
    %346 = vmatprep.subr.bf16.mxu0 0
    %347 = vmatpush2.bf16.msra.mxu0 0
    %348 = vmatprep.mubr.bf16.mxu0 0
    %349 = vmatmul.mubr.bf16.gmra.mxu0 %v154
    %v350 = vpop.f32.mrf.mxu0
    %v351 = vadd.f32 %v133, %v350
    %v352 = vpop.f32.mrf.mxu0
    %v353 = vadd.f32 %v137, %v352
    %v354 = vpop.f32.mrf.mxu0
    %v355 = vadd.f32 %v133, %v354
    %v356 = vpop.f32.mrf.mxu0
    %v357 = vadd.f32 %v137, %v356
    %358 = vdwg.mxu0
    %359 = vmatprep.subr.bf16.mxu0 %v283
    %360 = vmatpush1.bf16.msra.mxu0 %v282
    %361 = vmatprep.subr.bf16.mxu0 %v279
    %362 = vmatpush1.bf16.msra.mxu0 %v278
    %363 = vmatprep.subr.bf16.mxu0 %v275
    %364 = vmatpush1.bf16.msra.mxu0 %v274
    %365 = vmatprep.subr.bf16.mxu0 %v271
    %366 = vmatpush1.bf16.msra.mxu0 %v270
    %367 = vmatprep.subr.bf16.mxu0 %v267
    %368 = vmatpush1.bf16.msra.mxu0 %v266
    %369 = vmatprep.subr.bf16.mxu0 %v263
    %370 = vmatpush1.bf16.msra.mxu0 %v262
    %371 = vmatprep.subr.bf16.mxu0 %v259
    %372 = vmatpush1.bf16.msra.mxu0 %v258
    %373 = vmatprep.subr.bf16.mxu0 %v255
    %374 = vmatpush1.bf16.msra.mxu0 %v254
    %375 = vmatprep.subr.bf16.mxu0 0
    %376 = vmatpush2.bf16.msra.mxu0 0
    %377 = vmatprep.subr.bf16.mxu0 0
    %378 = vmatpush2.bf16.msra.mxu0 0
    %379 = vmatprep.subr.bf16.mxu0 0
    %380 = vmatpush2.bf16.msra.mxu0 0
    %381 = vmatprep.subr.bf16.mxu0 0
    %382 = vmatpush2.bf16.msra.mxu0 0
    %383 = vmatprep.subr.bf16.mxu0 0
    %384 = vmatpush2.bf16.msra.mxu0 0
    %385 = vmatprep.subr.bf16.mxu0 0
    %386 = vmatpush2.bf16.msra.mxu0 0
    %387 = vmatprep.subr.bf16.mxu0 0
    %388 = vmatpush2.bf16.msra.mxu0 0
    %389 = vmatprep.subr.bf16.mxu0 0
    %390 = vmatpush2.bf16.msra.mxu0 0
    %391 = vmatprep.mubr.bf16.mxu0 0
    %392 = vmatmul.mubr.bf16.gmra.mxu0 %v154
    %v393 = vpop.f32.mrf.mxu0
    %v394 = vadd.f32 %v141, %v393
    %v395 = vpop.f32.mrf.mxu0
    %v396 = vadd.f32 %v145, %v395
    %v397 = vpop.f32.mrf.mxu0
    %v398 = vadd.f32 %v141, %v397
    %v399 = vpop.f32.mrf.mxu0
    %v400 = vadd.f32 %v145, %v399
    %401 = vdwg.mxu0
    %vm402 = vcmp.gt.f32.partialorder %v351, 0.0
    %vm403 = vcmp.gt.f32.partialorder %v353, 0.0
    %vm404 = vcmp.gt.f32.partialorder %v394, 0.0
    %vm405 = vcmp.gt.f32.partialorder %v396, 0.0
    %vm406 = vcmp.gt.f32.partialorder %v355, 0.0
    %vm407 = vcmp.gt.f32.partialorder %v357, 0.0
    %vm408 = vcmp.gt.f32.partialorder %v398, 0.0
    %vm409 = vcmp.gt.f32.partialorder %v400, 0.0
    %v410 = vmul.f32 %v351, 0.01
    %v411 = vmul.f32 %v353, 0.01
    %v412 = vmul.f32 %v394, 0.01
    %v413 = vmul.f32 %v396, 0.01
    %v414 = vmul.f32 %v355, 0.01
    %v415 = vmul.f32 %v357, 0.01
    %v416 = vmul.f32 %v398, 0.01
    %v417 = vmul.f32 %v400, 0.01
    %v418 = vsel %vm402, %v351, %v410
    %v419 = vsel %vm403, %v353, %v411
    %v420 = vsel %vm404, %v394, %v412
    %v421 = vsel %vm405, %v396, %v413
    %v422 = vsel %vm406, %v355, %v414
    %v423 = vsel %vm407, %v357, %v415
    %v424 = vsel %vm408, %v398, %v416
    %v425 = vsel %vm409, %v400, %v417
    %v426 = vpack.c.bf16 %v422, %v418
    %v427 = vpack.c.bf16 %v423, %v419
    %v428 = vpack.c.bf16 %v424, %v420
    %v429 = vpack.c.bf16 %v425, %v421
    %v430 = vld [vmem:[#allocation8] sm:$0xff]
    %v431 = vld [vmem:[#allocation8 + $0x8] sm:$0xff]
    %v432 = vld [vmem:[#allocation8 + $0x10] sm:$0xff]
    %v433 = vld [vmem:[#allocation8 + $0x18] sm:$0xff]
    %v434 = vld [vmem:[#allocation8 + $0x20] sm:$0xff]
    %v435 = vld [vmem:[#allocation8 + $0x28] sm:$0xff]
    %v436 = vld [vmem:[#allocation8 + $0x30] sm:$0xff]
    %v437 = vld [vmem:[#allocation8 + $0x38] sm:$0xff]
    %v438 = vld [vmem:[#allocation8 + $0x40] sm:$0xff]
    %v439 = vld [vmem:[#allocation8 + $0x48] sm:$0xff]
    %v440 = vld [vmem:[#allocation8 + $0x50] sm:$0xff]
    %v441 = vld [vmem:[#allocation8 + $0x58] sm:$0xff]
    %v442 = vld [vmem:[#allocation8 + $0x60] sm:$0xff]
    %v443 = vld [vmem:[#allocation8 + $0x68] sm:$0xff]
    %v444 = vld [vmem:[#allocation8 + $0x70] sm:$0xff]
    %v445 = vld [vmem:[#allocation8 + $0x78] sm:$0xff]
    %v446 = vld [vmem:[#allocation8 + $0x80] sm:$0xff]
    %v447 = vld [vmem:[#allocation8 + $0x88] sm:$0xff]
    %v448 = vld [vmem:[#allocation8 + $0x90] sm:$0xff]
    %v449 = vld [vmem:[#allocation8 + $0x98] sm:$0xff]
    %v450 = vld [vmem:[#allocation8 + $0xa0] sm:$0xff]
    %v451 = vld [vmem:[#allocation8 + $0xa8] sm:$0xff]
    %v452 = vld [vmem:[#allocation8 + $0xb0] sm:$0xff]
    %v453 = vld [vmem:[#allocation8 + $0xb8] sm:$0xff]
    %v454 = vld [vmem:[#allocation8 + $0xc0] sm:$0xff]
    %v455 = vld [vmem:[#allocation8 + $0xc8] sm:$0xff]
    %v456 = vld [vmem:[#allocation8 + $0xd0] sm:$0xff]
    %v457 = vld [vmem:[#allocation8 + $0xd8] sm:$0xff]
    %v458 = vld [vmem:[#allocation8 + $0xe0] sm:$0xff]
    %v459 = vld [vmem:[#allocation8 + $0xe8] sm:$0xff]
    %v460 = vld [vmem:[#allocation8 + $0xf0] sm:$0xff]
    %v461 = vld [vmem:[#allocation8 + $0xf8] sm:$0xff]
    %v462 = vld [vmem:[#allocation8 + $0x100] sm:$0xff]
    %v463 = vld [vmem:[#allocation8 + $0x108] sm:$0xff]
    %v464 = vld [vmem:[#allocation8 + $0x110] sm:$0xff]
    %v465 = vld [vmem:[#allocation8 + $0x118] sm:$0xff]
    %v466 = vld [vmem:[#allocation8 + $0x120] sm:$0xff]
    %v467 = vld [vmem:[#allocation8 + $0x128] sm:$0xff]
    %v468 = vld [vmem:[#allocation8 + $0x130] sm:$0xff]
    %v469 = vld [vmem:[#allocation8 + $0x138] sm:$0xff]
    %v470 = vld [vmem:[#allocation8 + $0x140] sm:$0xff]
    %v471 = vld [vmem:[#allocation8 + $0x148] sm:$0xff]
    %v472 = vld [vmem:[#allocation8 + $0x150] sm:$0xff]
    %v473 = vld [vmem:[#allocation8 + $0x158] sm:$0xff]
    %v474 = vld [vmem:[#allocation8 + $0x160] sm:$0xff]
    %v475 = vld [vmem:[#allocation8 + $0x168] sm:$0xff]
    %v476 = vld [vmem:[#allocation8 + $0x170] sm:$0xff]
    %v477 = vld [vmem:[#allocation8 + $0x178] sm:$0xff]
    %v478 = vld [vmem:[#allocation8 + $0x180] sm:$0xff]
    %v479 = vld [vmem:[#allocation8 + $0x188] sm:$0xff]
    %v480 = vld [vmem:[#allocation8 + $0x190] sm:$0xff]
    %v481 = vld [vmem:[#allocation8 + $0x198] sm:$0xff]
    %v482 = vld [vmem:[#allocation8 + $0x1a0] sm:$0xff]
    %v483 = vld [vmem:[#allocation8 + $0x1a8] sm:$0xff]
    %v484 = vld [vmem:[#allocation8 + $0x1b0] sm:$0xff]
    %v485 = vld [vmem:[#allocation8 + $0x1b8] sm:$0xff]
    %v486 = vld [vmem:[#allocation8 + $0x1c0] sm:$0xff]
    %v487 = vld [vmem:[#allocation8 + $0x1c8] sm:$0xff]
    %v488 = vld [vmem:[#allocation8 + $0x1d0] sm:$0xff]
    %v489 = vld [vmem:[#allocation8 + $0x1d8] sm:$0xff]
    %v490 = vld [vmem:[#allocation8 + $0x1e0] sm:$0xff]
    %v491 = vld [vmem:[#allocation8 + $0x1e8] sm:$0xff]
    %v492 = vld [vmem:[#allocation8 + $0x1f0] sm:$0xff]
    %v493 = vld [vmem:[#allocation8 + $0x1f8] sm:$0xff]
    %v494 = vld [vmem:[#allocation8 + $0x200] sm:$0xff]
    %v495 = vld [vmem:[#allocation8 + $0x208] sm:$0xff]
    %v496 = vld [vmem:[#allocation8 + $0x210] sm:$0xff]
    %v497 = vld [vmem:[#allocation8 + $0x218] sm:$0xff]
    %v498 = vld [vmem:[#allocation8 + $0x220] sm:$0xff]
    %v499 = vld [vmem:[#allocation8 + $0x228] sm:$0xff]
    %v500 = vld [vmem:[#allocation8 + $0x230] sm:$0xff]
    %v501 = vld [vmem:[#allocation8 + $0x238] sm:$0xff]
    %v502 = vld [vmem:[#allocation8 + $0x240] sm:$0xff]
    %v503 = vld [vmem:[#allocation8 + $0x248] sm:$0xff]
    %v504 = vld [vmem:[#allocation8 + $0x250] sm:$0xff]
    %v505 = vld [vmem:[#allocation8 + $0x258] sm:$0xff]
    %v506 = vld [vmem:[#allocation8 + $0x260] sm:$0xff]
    %v507 = vld [vmem:[#allocation8 + $0x268] sm:$0xff]
    %v508 = vld [vmem:[#allocation8 + $0x270] sm:$0xff]
    %v509 = vld [vmem:[#allocation8 + $0x278] sm:$0xff]
    %v510 = vld [vmem:[#allocation8 + $0x280] sm:$0xff]
    %v511 = vld [vmem:[#allocation8 + $0x288] sm:$0xff]
    %v512 = vld [vmem:[#allocation8 + $0x290] sm:$0xff]
    %v513 = vld [vmem:[#allocation8 + $0x298] sm:$0xff]
    %v514 = vld [vmem:[#allocation8 + $0x2a0] sm:$0xff]
    %v515 = vld [vmem:[#allocation8 + $0x2a8] sm:$0xff]
    %v516 = vld [vmem:[#allocation8 + $0x2b0] sm:$0xff]
    %v517 = vld [vmem:[#allocation8 + $0x2b8] sm:$0xff]
    %v518 = vld [vmem:[#allocation8 + $0x2c0] sm:$0xff]
    %v519 = vld [vmem:[#allocation8 + $0x2c8] sm:$0xff]
    %v520 = vld [vmem:[#allocation8 + $0x2d0] sm:$0xff]
    %v521 = vld [vmem:[#allocation8 + $0x2d8] sm:$0xff]
    %v522 = vld [vmem:[#allocation8 + $0x2e0] sm:$0xff]
    %v523 = vld [vmem:[#allocation8 + $0x2e8] sm:$0xff]
    %v524 = vld [vmem:[#allocation8 + $0x2f0] sm:$0xff]
    %v525 = vld [vmem:[#allocation8 + $0x2f8] sm:$0xff]
    %v526 = vld [vmem:[#allocation8 + $0x300] sm:$0xff]
    %v527 = vld [vmem:[#allocation8 + $0x308] sm:$0xff]
    %v528 = vld [vmem:[#allocation8 + $0x310] sm:$0xff]
    %v529 = vld [vmem:[#allocation8 + $0x318] sm:$0xff]
    %v530 = vld [vmem:[#allocation8 + $0x320] sm:$0xff]
    %v531 = vld [vmem:[#allocation8 + $0x328] sm:$0xff]
    %v532 = vld [vmem:[#allocation8 + $0x330] sm:$0xff]
    %v533 = vld [vmem:[#allocation8 + $0x338] sm:$0xff]
    %v534 = vld [vmem:[#allocation8 + $0x340] sm:$0xff]
    %v535 = vld [vmem:[#allocation8 + $0x348] sm:$0xff]
    %v536 = vld [vmem:[#allocation8 + $0x350] sm:$0xff]
    %v537 = vld [vmem:[#allocation8 + $0x358] sm:$0xff]
    %v538 = vld [vmem:[#allocation8 + $0x360] sm:$0xff]
    %v539 = vld [vmem:[#allocation8 + $0x368] sm:$0xff]
    %v540 = vld [vmem:[#allocation8 + $0x370] sm:$0xff]
    %v541 = vld [vmem:[#allocation8 + $0x378] sm:$0xff]
    %v542 = vld [vmem:[#allocation8 + $0x380] sm:$0xff]
    %v543 = vld [vmem:[#allocation8 + $0x388] sm:$0xff]
    %v544 = vld [vmem:[#allocation8 + $0x390] sm:$0xff]
    %v545 = vld [vmem:[#allocation8 + $0x398] sm:$0xff]
    %v546 = vld [vmem:[#allocation8 + $0x3a0] sm:$0xff]
    %v547 = vld [vmem:[#allocation8 + $0x3a8] sm:$0xff]
    %v548 = vld [vmem:[#allocation8 + $0x3b0] sm:$0xff]
    %v549 = vld [vmem:[#allocation8 + $0x3b8] sm:$0xff]
    %v550 = vld [vmem:[#allocation8 + $0x3c0] sm:$0xff]
    %v551 = vld [vmem:[#allocation8 + $0x3c8] sm:$0xff]
    %v552 = vld [vmem:[#allocation8 + $0x3d0] sm:$0xff]
    %v553 = vld [vmem:[#allocation8 + $0x3d8] sm:$0xff]
    %v554 = vld [vmem:[#allocation8 + $0x3e0] sm:$0xff]
    %v555 = vld [vmem:[#allocation8 + $0x3e8] sm:$0xff]
    %v556 = vld [vmem:[#allocation8 + $0x3f0] sm:$0xff]
    %v557 = vld [vmem:[#allocation8 + $0x3f8] sm:$0xff]
    %v558 = vld [vmem:[%s4] sm:$0xf]
    %v560 = vlaneseq
    %v561 = vshrl.u32 %v560, 7
    %v562 = vsub.s32 0, %v561
    %v563 = vrot.slane %v558, %v562
    %v564 = vlaneseq
    %v565 = vshrl.u32 %v564, 7
    %v566 = vsub.s32 1, %v565
    %v567 = vrot.slane %v558, %v566
    %v568 = vlaneseq
    %v569 = vshrl.u32 %v568, 7
    %v570 = vsub.s32 2, %v569
    %v571 = vrot.slane %v558, %v570
    %v572 = vlaneseq
    %v573 = vshrl.u32 %v572, 7
    %v574 = vsub.s32 3, %v573
    %v575 = vrot.slane %v558, %v574
    %v708 = vunpack.c.l.b16 %v430
    %v709 = vunpack.c.h.b16 %v430
    %v710 = vunpack.c.l.b16 %v431
    %v711 = vunpack.c.h.b16 %v431
    %v712 = vunpack.c.l.b16 %v432
    %v713 = vunpack.c.h.b16 %v432
    %v714 = vunpack.c.l.b16 %v433
    %v715 = vunpack.c.h.b16 %v433
    %v716 = vunpack.c.l.b16 %v434
    %v717 = vunpack.c.h.b16 %v434
    %v718 = vunpack.c.l.b16 %v435
    %v719 = vunpack.c.h.b16 %v435
    %v720 = vunpack.c.l.b16 %v436
    %v721 = vunpack.c.h.b16 %v436
    %v722 = vunpack.c.l.b16 %v437
    %v723 = vunpack.c.h.b16 %v437
    %v724 = vunpack.c.l.b16 %v438
    %v725 = vunpack.c.h.b16 %v438
    %v726 = vunpack.c.l.b16 %v439
    %v727 = vunpack.c.h.b16 %v439
    %v728 = vunpack.c.l.b16 %v440
    %v729 = vunpack.c.h.b16 %v440
    %v730 = vunpack.c.l.b16 %v441
    %v731 = vunpack.c.h.b16 %v441
    %v732 = vunpack.c.l.b16 %v442
    %v733 = vunpack.c.h.b16 %v442
    %v734 = vunpack.c.l.b16 %v443
    %v735 = vunpack.c.h.b16 %v443
    %v736 = vunpack.c.l.b16 %v444
    %v737 = vunpack.c.h.b16 %v444
    %v738 = vunpack.c.l.b16 %v445
    %v739 = vunpack.c.h.b16 %v445
    %v740 = vunpack.c.l.b16 %v446
    %v741 = vunpack.c.h.b16 %v446
    %v742 = vunpack.c.l.b16 %v447
    %v743 = vunpack.c.h.b16 %v447
    %v744 = vunpack.c.l.b16 %v448
    %v745 = vunpack.c.h.b16 %v448
    %v746 = vunpack.c.l.b16 %v449
    %v747 = vunpack.c.h.b16 %v449
    %v748 = vunpack.c.l.b16 %v450
    %v749 = vunpack.c.h.b16 %v450
    %v750 = vunpack.c.l.b16 %v451
    %v751 = vunpack.c.h.b16 %v451
    %v752 = vunpack.c.l.b16 %v452
    %v753 = vunpack.c.h.b16 %v452
    %v754 = vunpack.c.l.b16 %v453
    %v755 = vunpack.c.h.b16 %v453
    %v756 = vunpack.c.l.b16 %v454
    %v757 = vunpack.c.h.b16 %v454
    %v758 = vunpack.c.l.b16 %v455
    %v759 = vunpack.c.h.b16 %v455
    %v760 = vunpack.c.l.b16 %v456
    %v761 = vunpack.c.h.b16 %v456
    %v762 = vunpack.c.l.b16 %v457
    %v763 = vunpack.c.h.b16 %v457
    %v764 = vunpack.c.l.b16 %v458
    %v765 = vunpack.c.h.b16 %v458
    %v766 = vunpack.c.l.b16 %v459
    %v767 = vunpack.c.h.b16 %v459
    %v768 = vunpack.c.l.b16 %v460
    %v769 = vunpack.c.h.b16 %v460
    %v770 = vunpack.c.l.b16 %v461
    %v771 = vunpack.c.h.b16 %v461
    %v772 = vunpack.c.l.b16 %v462
    %v773 = vunpack.c.h.b16 %v462
    %v774 = vunpack.c.l.b16 %v463
    %v775 = vunpack.c.h.b16 %v463
    %v776 = vunpack.c.l.b16 %v464
    %v777 = vunpack.c.h.b16 %v464
    %v778 = vunpack.c.l.b16 %v465
    %v779 = vunpack.c.h.b16 %v465
    %v780 = vunpack.c.l.b16 %v466
    %v781 = vunpack.c.h.b16 %v466
    %v782 = vunpack.c.l.b16 %v467
    %v783 = vunpack.c.h.b16 %v467
    %v784 = vunpack.c.l.b16 %v468
    %v785 = vunpack.c.h.b16 %v468
    %v786 = vunpack.c.l.b16 %v469
    %v787 = vunpack.c.h.b16 %v469
    %v788 = vunpack.c.l.b16 %v470
    %v789 = vunpack.c.h.b16 %v470
    %v790 = vunpack.c.l.b16 %v471
    %v791 = vunpack.c.h.b16 %v471
    %v792 = vunpack.c.l.b16 %v472
    %v793 = vunpack.c.h.b16 %v472
    %v794 = vunpack.c.l.b16 %v473
    %v795 = vunpack.c.h.b16 %v473
    %v796 = vunpack.c.l.b16 %v474
    %v797 = vunpack.c.h.b16 %v474
    %v798 = vunpack.c.l.b16 %v475
    %v799 = vunpack.c.h.b16 %v475
    %v800 = vunpack.c.l.b16 %v476
    %v801 = vunpack.c.h.b16 %v476
    %v802 = vunpack.c.l.b16 %v477
    %v803 = vunpack.c.h.b16 %v477
    %v804 = vunpack.c.l.b16 %v478
    %v805 = vunpack.c.h.b16 %v478
    %v806 = vunpack.c.l.b16 %v479
    %v807 = vunpack.c.h.b16 %v479
    %v808 = vunpack.c.l.b16 %v480
    %v809 = vunpack.c.h.b16 %v480
    %v810 = vunpack.c.l.b16 %v481
    %v811 = vunpack.c.h.b16 %v481
    %v812 = vunpack.c.l.b16 %v482
    %v813 = vunpack.c.h.b16 %v482
    %v814 = vunpack.c.l.b16 %v483
    %v815 = vunpack.c.h.b16 %v483
    %v816 = vunpack.c.l.b16 %v484
    %v817 = vunpack.c.h.b16 %v484
    %v818 = vunpack.c.l.b16 %v485
    %v819 = vunpack.c.h.b16 %v485
    %v820 = vunpack.c.l.b16 %v486
    %v821 = vunpack.c.h.b16 %v486
    %v822 = vunpack.c.l.b16 %v487
    %v823 = vunpack.c.h.b16 %v487
    %v824 = vunpack.c.l.b16 %v488
    %v825 = vunpack.c.h.b16 %v488
    %v826 = vunpack.c.l.b16 %v489
    %v827 = vunpack.c.h.b16 %v489
    %v828 = vunpack.c.l.b16 %v490
    %v829 = vunpack.c.h.b16 %v490
    %v830 = vunpack.c.l.b16 %v491
    %v831 = vunpack.c.h.b16 %v491
    %v832 = vunpack.c.l.b16 %v492
    %v833 = vunpack.c.h.b16 %v492
    %v834 = vunpack.c.l.b16 %v493
    %v835 = vunpack.c.h.b16 %v493
    %v836 = vunpack.c.l.b16 %v494
    %v837 = vunpack.c.h.b16 %v494
    %v838 = vunpack.c.l.b16 %v495
    %v839 = vunpack.c.h.b16 %v495
    %v840 = vunpack.c.l.b16 %v496
    %v841 = vunpack.c.h.b16 %v496
    %v842 = vunpack.c.l.b16 %v497
    %v843 = vunpack.c.h.b16 %v497
    %v844 = vunpack.c.l.b16 %v498
    %v845 = vunpack.c.h.b16 %v498
    %v846 = vunpack.c.l.b16 %v499
    %v847 = vunpack.c.h.b16 %v499
    %v848 = vunpack.c.l.b16 %v500
    %v849 = vunpack.c.h.b16 %v500
    %v850 = vunpack.c.l.b16 %v501
    %v851 = vunpack.c.h.b16 %v501
    %v852 = vunpack.c.l.b16 %v502
    %v853 = vunpack.c.h.b16 %v502
    %v854 = vunpack.c.l.b16 %v503
    %v855 = vunpack.c.h.b16 %v503
    %v856 = vunpack.c.l.b16 %v504
    %v857 = vunpack.c.h.b16 %v504
    %v858 = vunpack.c.l.b16 %v505
    %v859 = vunpack.c.h.b16 %v505
    %v860 = vunpack.c.l.b16 %v506
    %v861 = vunpack.c.h.b16 %v506
    %v862 = vunpack.c.l.b16 %v507
    %v863 = vunpack.c.h.b16 %v507
    %v864 = vunpack.c.l.b16 %v508
    %v865 = vunpack.c.h.b16 %v508
    %v866 = vunpack.c.l.b16 %v509
    %v867 = vunpack.c.h.b16 %v509
    %v868 = vunpack.c.l.b16 %v510
    %v869 = vunpack.c.h.b16 %v510
    %v870 = vunpack.c.l.b16 %v511
    %v871 = vunpack.c.h.b16 %v511
    %v872 = vunpack.c.l.b16 %v512
    %v873 = vunpack.c.h.b16 %v512
    %v874 = vunpack.c.l.b16 %v513
    %v875 = vunpack.c.h.b16 %v513
    %v876 = vunpack.c.l.b16 %v514
    %v877 = vunpack.c.h.b16 %v514
    %v878 = vunpack.c.l.b16 %v515
    %v879 = vunpack.c.h.b16 %v515
    %v880 = vunpack.c.l.b16 %v516
    %v881 = vunpack.c.h.b16 %v516
    %v882 = vunpack.c.l.b16 %v517
    %v883 = vunpack.c.h.b16 %v517
    %v884 = vunpack.c.l.b16 %v518
    %v885 = vunpack.c.h.b16 %v518
    %v886 = vunpack.c.l.b16 %v519
    %v887 = vunpack.c.h.b16 %v519
    %v888 = vunpack.c.l.b16 %v520
    %v889 = vunpack.c.h.b16 %v520
    %v890 = vunpack.c.l.b16 %v521
    %v891 = vunpack.c.h.b16 %v521
    %v892 = vunpack.c.l.b16 %v522
    %v893 = vunpack.c.h.b16 %v522
    %v894 = vunpack.c.l.b16 %v523
    %v895 = vunpack.c.h.b16 %v523
    %v896 = vunpack.c.l.b16 %v524
    %v897 = vunpack.c.h.b16 %v524
    %v898 = vunpack.c.l.b16 %v525
    %v899 = vunpack.c.h.b16 %v525
    %v900 = vunpack.c.l.b16 %v526
    %v901 = vunpack.c.h.b16 %v526
    %v902 = vunpack.c.l.b16 %v527
    %v903 = vunpack.c.h.b16 %v527
    %v904 = vunpack.c.l.b16 %v528
    %v905 = vunpack.c.h.b16 %v528
    %v906 = vunpack.c.l.b16 %v529
    %v907 = vunpack.c.h.b16 %v529
    %v908 = vunpack.c.l.b16 %v530
    %v909 = vunpack.c.h.b16 %v530
    %v910 = vunpack.c.l.b16 %v531
    %v911 = vunpack.c.h.b16 %v531
    %v912 = vunpack.c.l.b16 %v532
    %v913 = vunpack.c.h.b16 %v532
    %v914 = vunpack.c.l.b16 %v533
    %v915 = vunpack.c.h.b16 %v533
    %v916 = vunpack.c.l.b16 %v534
    %v917 = vunpack.c.h.b16 %v534
    %v918 = vunpack.c.l.b16 %v535
    %v919 = vunpack.c.h.b16 %v535
    %v920 = vunpack.c.l.b16 %v536
    %v921 = vunpack.c.h.b16 %v536
    %v922 = vunpack.c.l.b16 %v537
    %v923 = vunpack.c.h.b16 %v537
    %v924 = vunpack.c.l.b16 %v538
    %v925 = vunpack.c.h.b16 %v538
    %v926 = vunpack.c.l.b16 %v539
    %v927 = vunpack.c.h.b16 %v539
    %v928 = vunpack.c.l.b16 %v540
    %v929 = vunpack.c.h.b16 %v540
    %v930 = vunpack.c.l.b16 %v541
    %v931 = vunpack.c.h.b16 %v541
    %v932 = vunpack.c.l.b16 %v542
    %v933 = vunpack.c.h.b16 %v542
    %v934 = vunpack.c.l.b16 %v543
    %v935 = vunpack.c.h.b16 %v543
    %v936 = vunpack.c.l.b16 %v544
    %v937 = vunpack.c.h.b16 %v544
    %v938 = vunpack.c.l.b16 %v545
    %v939 = vunpack.c.h.b16 %v545
    %v940 = vunpack.c.l.b16 %v546
    %v941 = vunpack.c.h.b16 %v546
    %v942 = vunpack.c.l.b16 %v547
    %v943 = vunpack.c.h.b16 %v547
    %v944 = vunpack.c.l.b16 %v548
    %v945 = vunpack.c.h.b16 %v548
    %v946 = vunpack.c.l.b16 %v549
    %v947 = vunpack.c.h.b16 %v549
    %v948 = vunpack.c.l.b16 %v550
    %v949 = vunpack.c.h.b16 %v550
    %v950 = vunpack.c.l.b16 %v551
    %v951 = vunpack.c.h.b16 %v551
    %v952 = vunpack.c.l.b16 %v552
    %v953 = vunpack.c.h.b16 %v552
    %v954 = vunpack.c.l.b16 %v553
    %v955 = vunpack.c.h.b16 %v553
    %v956 = vunpack.c.l.b16 %v554
    %v957 = vunpack.c.h.b16 %v554
    %v958 = vunpack.c.l.b16 %v555
    %v959 = vunpack.c.h.b16 %v555
    %v960 = vunpack.c.l.b16 %v556
    %v961 = vunpack.c.h.b16 %v556
    %v962 = vunpack.c.l.b16 %v557
    %v963 = vunpack.c.h.b16 %v557
    %v964 = vpack.c.b16 %v712, %v708
    %v965 = vpack.c.b16 %v713, %v709
    %v966 = vpack.c.b16 %v714, %v710
    %v967 = vpack.c.b16 %v715, %v711
    %v968 = vpack.c.b16 %v720, %v716
    %v969 = vpack.c.b16 %v721, %v717
    %v970 = vpack.c.b16 %v722, %v718
    %v971 = vpack.c.b16 %v723, %v719
    %v972 = vpack.c.b16 %v728, %v724
    %v973 = vpack.c.b16 %v729, %v725
    %v974 = vpack.c.b16 %v730, %v726
    %v975 = vpack.c.b16 %v731, %v727
    %v976 = vpack.c.b16 %v736, %v732
    %v977 = vpack.c.b16 %v737, %v733
    %v978 = vpack.c.b16 %v738, %v734
    %v979 = vpack.c.b16 %v739, %v735
    %v980 = vpack.c.b16 %v744, %v740
    %v981 = vpack.c.b16 %v745, %v741
    %v982 = vpack.c.b16 %v746, %v742
    %v983 = vpack.c.b16 %v747, %v743
    %v984 = vpack.c.b16 %v752, %v748
    %v985 = vpack.c.b16 %v753, %v749
    %v986 = vpack.c.b16 %v754, %v750
    %v987 = vpack.c.b16 %v755, %v751
    %v988 = vpack.c.b16 %v760, %v756
    %v989 = vpack.c.b16 %v761, %v757
    %v990 = vpack.c.b16 %v762, %v758
    %v991 = vpack.c.b16 %v763, %v759
    %v992 = vpack.c.b16 %v768, %v764
    %v993 = vpack.c.b16 %v769, %v765
    %v994 = vpack.c.b16 %v770, %v766
    %v995 = vpack.c.b16 %v771, %v767
    %v996 = vpack.c.b16 %v776, %v772
    %v997 = vpack.c.b16 %v777, %v773
    %v998 = vpack.c.b16 %v778, %v774
    %v999 = vpack.c.b16 %v779, %v775
    %v1000 = vpack.c.b16 %v784, %v780
    %v1001 = vpack.c.b16 %v785, %v781
    %v1002 = vpack.c.b16 %v786, %v782
    %v1003 = vpack.c.b16 %v787, %v783
    %v1004 = vpack.c.b16 %v792, %v788
    %v1005 = vpack.c.b16 %v793, %v789
    %v1006 = vpack.c.b16 %v794, %v790
    %v1007 = vpack.c.b16 %v795, %v791
    %v1008 = vpack.c.b16 %v800, %v796
    %v1009 = vpack.c.b16 %v801, %v797
    %v1010 = vpack.c.b16 %v802, %v798
    %v1011 = vpack.c.b16 %v803, %v799
    %v1012 = vpack.c.b16 %v808, %v804
    %v1013 = vpack.c.b16 %v809, %v805
    %v1014 = vpack.c.b16 %v810, %v806
    %v1015 = vpack.c.b16 %v811, %v807
    %v1016 = vpack.c.b16 %v816, %v812
    %v1017 = vpack.c.b16 %v817, %v813
    %v1018 = vpack.c.b16 %v818, %v814
    %v1019 = vpack.c.b16 %v819, %v815
    %v1020 = vpack.c.b16 %v824, %v820
    %v1021 = vpack.c.b16 %v825, %v821
    %v1022 = vpack.c.b16 %v826, %v822
    %v1023 = vpack.c.b16 %v827, %v823
    %v1024 = vpack.c.b16 %v832, %v828
    %v1025 = vpack.c.b16 %v833, %v829
    %v1026 = vpack.c.b16 %v834, %v830
    %v1027 = vpack.c.b16 %v835, %v831
    %v1028 = vpack.c.b16 %v840, %v836
    %v1029 = vpack.c.b16 %v841, %v837
    %v1030 = vpack.c.b16 %v842, %v838
    %v1031 = vpack.c.b16 %v843, %v839
    %v1032 = vpack.c.b16 %v848, %v844
    %v1033 = vpack.c.b16 %v849, %v845
    %v1034 = vpack.c.b16 %v850, %v846
    %v1035 = vpack.c.b16 %v851, %v847
    %v1036 = vpack.c.b16 %v856, %v852
    %v1037 = vpack.c.b16 %v857, %v853
    %v1038 = vpack.c.b16 %v858, %v854
    %v1039 = vpack.c.b16 %v859, %v855
    %v1040 = vpack.c.b16 %v864, %v860
    %v1041 = vpack.c.b16 %v865, %v861
    %v1042 = vpack.c.b16 %v866, %v862
    %v1043 = vpack.c.b16 %v867, %v863
    %v1044 = vpack.c.b16 %v872, %v868
    %v1045 = vpack.c.b16 %v873, %v869
    %v1046 = vpack.c.b16 %v874, %v870
    %v1047 = vpack.c.b16 %v875, %v871
    %v1048 = vpack.c.b16 %v880, %v876
    %v1049 = vpack.c.b16 %v881, %v877
    %v1050 = vpack.c.b16 %v882, %v878
    %v1051 = vpack.c.b16 %v883, %v879
    %v1052 = vpack.c.b16 %v888, %v884
    %v1053 = vpack.c.b16 %v889, %v885
    %v1054 = vpack.c.b16 %v890, %v886
    %v1055 = vpack.c.b16 %v891, %v887
    %v1056 = vpack.c.b16 %v896, %v892
    %v1057 = vpack.c.b16 %v897, %v893
    %v1058 = vpack.c.b16 %v898, %v894
    %v1059 = vpack.c.b16 %v899, %v895
    %v1060 = vpack.c.b16 %v904, %v900
    %v1061 = vpack.c.b16 %v905, %v901
    %v1062 = vpack.c.b16 %v906, %v902
    %v1063 = vpack.c.b16 %v907, %v903
    %v1064 = vpack.c.b16 %v912, %v908
    %v1065 = vpack.c.b16 %v913, %v909
    %v1066 = vpack.c.b16 %v914, %v910
    %v1067 = vpack.c.b16 %v915, %v911
    %v1068 = vpack.c.b16 %v920, %v916
    %v1069 = vpack.c.b16 %v921, %v917
    %v1070 = vpack.c.b16 %v922, %v918
    %v1071 = vpack.c.b16 %v923, %v919
    %v1072 = vpack.c.b16 %v928, %v924
    %v1073 = vpack.c.b16 %v929, %v925
    %v1074 = vpack.c.b16 %v930, %v926
    %v1075 = vpack.c.b16 %v931, %v927
    %v1076 = vpack.c.b16 %v936, %v932
    %v1077 = vpack.c.b16 %v937, %v933
    %v1078 = vpack.c.b16 %v938, %v934
    %v1079 = vpack.c.b16 %v939, %v935
    %v1080 = vpack.c.b16 %v944, %v940
    %v1081 = vpack.c.b16 %v945, %v941
    %v1082 = vpack.c.b16 %v946, %v942
    %v1083 = vpack.c.b16 %v947, %v943
    %v1084 = vpack.c.b16 %v952, %v948
    %v1085 = vpack.c.b16 %v953, %v949
    %v1086 = vpack.c.b16 %v954, %v950
    %v1087 = vpack.c.b16 %v955, %v951
    %v1088 = vpack.c.b16 %v960, %v956
    %v1089 = vpack.c.b16 %v961, %v957
    %v1090 = vpack.c.b16 %v962, %v958
    %v1091 = vpack.c.b16 %v963, %v959
    %1220 = vmatprep.subr.bf16.mxu0 %v993
    %1221 = vmatpush1.bf16.msra.mxu0 %v992
    %1222 = vmatprep.subr.bf16.mxu0 %v989
    %1223 = vmatpush1.bf16.msra.mxu0 %v988
    %1224 = vmatprep.subr.bf16.mxu0 %v985
    %1225 = vmatpush1.bf16.msra.mxu0 %v984
    %1226 = vmatprep.subr.bf16.mxu0 %v981
    %1227 = vmatpush1.bf16.msra.mxu0 %v980
    %1228 = vmatprep.subr.bf16.mxu0 %v977
    %1229 = vmatpush1.bf16.msra.mxu0 %v976
    %1230 = vmatprep.subr.bf16.mxu0 %v973
    %1231 = vmatpush1.bf16.msra.mxu0 %v972
    %1232 = vmatprep.subr.bf16.mxu0 %v969
    %1233 = vmatpush1.bf16.msra.mxu0 %v968
    %1234 = vmatprep.subr.bf16.mxu0 %v965
    %1235 = vmatpush1.bf16.msra.mxu0 %v964
    %1236 = vmatprep.subr.bf16.mxu0 %v1025
    %1237 = vmatpush2.bf16.msra.mxu0 %v1024
    %1238 = vmatprep.subr.bf16.mxu0 %v1021
    %1239 = vmatpush2.bf16.msra.mxu0 %v1020
    %1240 = vmatprep.subr.bf16.mxu0 %v1017
    %1241 = vmatpush2.bf16.msra.mxu0 %v1016
    %1242 = vmatprep.subr.bf16.mxu0 %v1013
    %1243 = vmatpush2.bf16.msra.mxu0 %v1012
    %1244 = vmatprep.subr.bf16.mxu0 %v1009
    %1245 = vmatpush2.bf16.msra.mxu0 %v1008
    %1246 = vmatprep.subr.bf16.mxu0 %v1005
    %1247 = vmatpush2.bf16.msra.mxu0 %v1004
    %1248 = vmatprep.subr.bf16.mxu0 %v1001
    %1249 = vmatpush2.bf16.msra.mxu0 %v1000
    %1250 = vmatprep.subr.bf16.mxu0 %v997
    %1251 = vmatpush2.bf16.msra.mxu0 %v996
    %1252 = vmatprep.mubr.bf16.mxu0 %v427
    %1253 = vmatmul.mubr.bf16.gmra.mxu0 %v426
    %v1254 = vpop.f32.mrf.mxu0
    %v1255 = vadd.f32 %v563, %v1254
    %v1256 = vpop.f32.mrf.mxu0
    %v1257 = vadd.f32 %v567, %v1256
    %v1258 = vpop.f32.mrf.mxu0
    %v1259 = vadd.f32 %v563, %v1258
    %v1260 = vpop.f32.mrf.mxu0
    %v1261 = vadd.f32 %v567, %v1260
    %1262 = vdwg.mxu0
    %1263 = vmatprep.subr.bf16.mxu0 %v1057
    %1264 = vmatpush1.bf16.msra.mxu0 %v1056
    %1265 = vmatprep.subr.bf16.mxu0 %v1053
    %1266 = vmatpush1.bf16.msra.mxu0 %v1052
    %1267 = vmatprep.subr.bf16.mxu0 %v1049
    %1268 = vmatpush1.bf16.msra.mxu0 %v1048
    %1269 = vmatprep.subr.bf16.mxu0 %v1045
    %1270 = vmatpush1.bf16.msra.mxu0 %v1044
    %1271 = vmatprep.subr.bf16.mxu0 %v1041
    %1272 = vmatpush1.bf16.msra.mxu0 %v1040
    %1273 = vmatprep.subr.bf16.mxu0 %v1037
    %1274 = vmatpush1.bf16.msra.mxu0 %v1036
    %1275 = vmatprep.subr.bf16.mxu0 %v1033
    %1276 = vmatpush1.bf16.msra.mxu0 %v1032
    %1277 = vmatprep.subr.bf16.mxu0 %v1029
    %1278 = vmatpush1.bf16.msra.mxu0 %v1028
    %1279 = vmatprep.subr.bf16.mxu0 %v1089
    %1280 = vmatpush2.bf16.msra.mxu0 %v1088
    %1281 = vmatprep.subr.bf16.mxu0 %v1085
    %1282 = vmatpush2.bf16.msra.mxu0 %v1084
    %1283 = vmatprep.subr.bf16.mxu0 %v1081
    %1284 = vmatpush2.bf16.msra.mxu0 %v1080
    %1285 = vmatprep.subr.bf16.mxu0 %v1077
    %1286 = vmatpush2.bf16.msra.mxu0 %v1076
    %1287 = vmatprep.subr.bf16.mxu0 %v1073
    %1288 = vmatpush2.bf16.msra.mxu0 %v1072
    %1289 = vmatprep.subr.bf16.mxu0 %v1069
    %1290 = vmatpush2.bf16.msra.mxu0 %v1068
    %1291 = vmatprep.subr.bf16.mxu0 %v1065
    %1292 = vmatpush2.bf16.msra.mxu0 %v1064
    %1293 = vmatprep.subr.bf16.mxu0 %v1061
    %1294 = vmatpush2.bf16.msra.mxu0 %v1060
    %1295 = vmatprep.mubr.bf16.mxu0 %v429
    %1296 = vmatmul.mubr.bf16.gmra.mxu0 %v428
    %v1297 = vpop.f32.mrf.mxu0
    %v1298 = vadd.f32 %v1255, %v1297
    %v1299 = vpop.f32.mrf.mxu0
    %v1300 = vadd.f32 %v1257, %v1299
    %v1301 = vpop.f32.mrf.mxu0
    %v1302 = vadd.f32 %v1259, %v1301
    %v1303 = vpop.f32.mrf.mxu0
    %v1304 = vadd.f32 %v1261, %v1303
    %1305 = vdwg.mxu0
    %1306 = vmatprep.subr.bf16.mxu0 %v995
    %1307 = vmatpush1.bf16.msra.mxu0 %v994
    %1308 = vmatprep.subr.bf16.mxu0 %v991
    %1309 = vmatpush1.bf16.msra.mxu0 %v990
    %1310 = vmatprep.subr.bf16.mxu0 %v987
    %1311 = vmatpush1.bf16.msra.mxu0 %v986
    %1312 = vmatprep.subr.bf16.mxu0 %v983
    %1313 = vmatpush1.bf16.msra.mxu0 %v982
    %1314 = vmatprep.subr.bf16.mxu0 %v979
    %1315 = vmatpush1.bf16.msra.mxu0 %v978
    %1316 = vmatprep.subr.bf16.mxu0 %v975
    %1317 = vmatpush1.bf16.msra.mxu0 %v974
    %1318 = vmatprep.subr.bf16.mxu0 %v971
    %1319 = vmatpush1.bf16.msra.mxu0 %v970
    %1320 = vmatprep.subr.bf16.mxu0 %v967
    %1321 = vmatpush1.bf16.msra.mxu0 %v966
    %1322 = vmatprep.subr.bf16.mxu0 %v1027
    %1323 = vmatpush2.bf16.msra.mxu0 %v1026
    %1324 = vmatprep.subr.bf16.mxu0 %v1023
    %1325 = vmatpush2.bf16.msra.mxu0 %v1022
    %1326 = vmatprep.subr.bf16.mxu0 %v1019
    %1327 = vmatpush2.bf16.msra.mxu0 %v1018
    %1328 = vmatprep.subr.bf16.mxu0 %v1015
    %1329 = vmatpush2.bf16.msra.mxu0 %v1014
    %1330 = vmatprep.subr.bf16.mxu0 %v1011
    %1331 = vmatpush2.bf16.msra.mxu0 %v1010
    %1332 = vmatprep.subr.bf16.mxu0 %v1007
    %1333 = vmatpush2.bf16.msra.mxu0 %v1006
    %1334 = vmatprep.subr.bf16.mxu0 %v1003
    %1335 = vmatpush2.bf16.msra.mxu0 %v1002
    %1336 = vmatprep.subr.bf16.mxu0 %v999
    %1337 = vmatpush2.bf16.msra.mxu0 %v998
    %1338 = vmatprep.mubr.bf16.mxu0 %v427
    %1339 = vmatmul.mubr.bf16.gmra.mxu0 %v426
    %v1340 = vpop.f32.mrf.mxu0
    %v1341 = vadd.f32 %v571, %v1340
    %v1342 = vpop.f32.mrf.mxu0
    %v1343 = vadd.f32 %v575, %v1342
    %v1344 = vpop.f32.mrf.mxu0
    %v1345 = vadd.f32 %v571, %v1344
    %v1346 = vpop.f32.mrf.mxu0
    %v1347 = vadd.f32 %v575, %v1346
    %1348 = vdwg.mxu0
    %1349 = vmatprep.subr.bf16.mxu0 %v1059
    %1350 = vmatpush1.bf16.msra.mxu0 %v1058
    %1351 = vmatprep.subr.bf16.mxu0 %v1055
    %1352 = vmatpush1.bf16.msra.mxu0 %v1054
    %1353 = vmatprep.subr.bf16.mxu0 %v1051
    %1354 = vmatpush1.bf16.msra.mxu0 %v1050
    %1355 = vmatprep.subr.bf16.mxu0 %v1047
    %1356 = vmatpush1.bf16.msra.mxu0 %v1046
    %1357 = vmatprep.subr.bf16.mxu0 %v1043
    %1358 = vmatpush1.bf16.msra.mxu0 %v1042
    %1359 = vmatprep.subr.bf16.mxu0 %v1039
    %1360 = vmatpush1.bf16.msra.mxu0 %v1038
    %1361 = vmatprep.subr.bf16.mxu0 %v1035
    %1362 = vmatpush1.bf16.msra.mxu0 %v1034
    %1363 = vmatprep.subr.bf16.mxu0 %v1031
    %1364 = vmatpush1.bf16.msra.mxu0 %v1030
    %1365 = vmatprep.subr.bf16.mxu0 %v1091
    %1366 = vmatpush2.bf16.msra.mxu0 %v1090
    %1367 = vmatprep.subr.bf16.mxu0 %v1087
    %1368 = vmatpush2.bf16.msra.mxu0 %v1086
    %1369 = vmatprep.subr.bf16.mxu0 %v1083
    %1370 = vmatpush2.bf16.msra.mxu0 %v1082
    %1371 = vmatprep.subr.bf16.mxu0 %v1079
    %1372 = vmatpush2.bf16.msra.mxu0 %v1078
    %1373 = vmatprep.subr.bf16.mxu0 %v1075
    %1374 = vmatpush2.bf16.msra.mxu0 %v1074
    %1375 = vmatprep.subr.bf16.mxu0 %v1071
    %1376 = vmatpush2.bf16.msra.mxu0 %v1070
    %1377 = vmatprep.subr.bf16.mxu0 %v1067
    %1378 = vmatpush2.bf16.msra.mxu0 %v1066
    %1379 = vmatprep.subr.bf16.mxu0 %v1063
    %1380 = vmatpush2.bf16.msra.mxu0 %v1062
    %1381 = vmatprep.mubr.bf16.mxu0 %v429
    %1382 = vmatmul.mubr.bf16.gmra.mxu0 %v428
    %v1383 = vpop.f32.mrf.mxu0
    %v1384 = vadd.f32 %v1341, %v1383
    %v1385 = vpop.f32.mrf.mxu0
    %v1386 = vadd.f32 %v1343, %v1385
    %v1387 = vpop.f32.mrf.mxu0
    %v1388 = vadd.f32 %v1345, %v1387
    %v1389 = vpop.f32.mrf.mxu0
    %v1390 = vadd.f32 %v1347, %v1389
    %1391 = vdwg.mxu0
    %vm1392 = vcmp.gt.f32.partialorder %v1298, 0.0
    %vm1393 = vcmp.gt.f32.partialorder %v1300, 0.0
    %vm1394 = vcmp.gt.f32.partialorder %v1384, 0.0
    %vm1395 = vcmp.gt.f32.partialorder %v1386, 0.0
    %vm1396 = vcmp.gt.f32.partialorder %v1302, 0.0
    %vm1397 = vcmp.gt.f32.partialorder %v1304, 0.0
    %vm1398 = vcmp.gt.f32.partialorder %v1388, 0.0
    %vm1399 = vcmp.gt.f32.partialorder %v1390, 0.0
    %v1400 = vmul.f32 %v1298, 0.01
    %v1401 = vmul.f32 %v1300, 0.01
    %v1402 = vmul.f32 %v1384, 0.01
    %v1403 = vmul.f32 %v1386, 0.01
    %v1404 = vmul.f32 %v1302, 0.01
    %v1405 = vmul.f32 %v1304, 0.01
    %v1406 = vmul.f32 %v1388, 0.01
    %v1407 = vmul.f32 %v1390, 0.01
    %v1408 = vsel %vm1392, %v1298, %v1400
    %v1409 = vsel %vm1393, %v1300, %v1401
    %v1410 = vsel %vm1394, %v1384, %v1402
    %v1411 = vsel %vm1395, %v1386, %v1403
    %v1412 = vsel %vm1396, %v1302, %v1404
    %v1413 = vsel %vm1397, %v1304, %v1405
    %v1414 = vsel %vm1398, %v1388, %v1406
    %v1415 = vsel %vm1399, %v1390, %v1407
    %v1416 = vpack.c.bf16 %v1412, %v1408
    %v1417 = vpack.c.bf16 %v1413, %v1409
    %v1418 = vpack.c.bf16 %v1414, %v1410
    %v1419 = vpack.c.bf16 %v1415, %v1411
    %v1420 = vld [vmem:[#allocation10] sm:$0xf]
    %v1421 = vld [vmem:[#allocation10 + $0x4] sm:$0xf]
    %v1422 = vld [vmem:[#allocation10 + $0x8] sm:$0xf]
    %v1423 = vld [vmem:[#allocation10 + $0xc] sm:$0xf]
    %v1424 = vld [vmem:[#allocation10 + $0x10] sm:$0xf]
    %v1425 = vld [vmem:[#allocation10 + $0x14] sm:$0xf]
    %v1426 = vld [vmem:[#allocation10 + $0x18] sm:$0xf]
    %v1427 = vld [vmem:[#allocation10 + $0x1c] sm:$0xf]
    %v1428 = vld [vmem:[#allocation10 + $0x20] sm:$0xf]
    %v1429 = vld [vmem:[#allocation10 + $0x24] sm:$0xf]
    %v1430 = vld [vmem:[#allocation10 + $0x28] sm:$0xf]
    %v1431 = vld [vmem:[#allocation10 + $0x2c] sm:$0xf]
    %v1432 = vld [vmem:[#allocation10 + $0x30] sm:$0xf]
    %v1433 = vld [vmem:[#allocation10 + $0x34] sm:$0xf]
    %v1434 = vld [vmem:[#allocation10 + $0x38] sm:$0xf]
    %v1435 = vld [vmem:[#allocation10 + $0x3c] sm:$0xf]
    %v1436 = vld [vmem:[#allocation10 + $0x40] sm:$0xf]
    %v1437 = vld [vmem:[#allocation10 + $0x44] sm:$0xf]
    %v1438 = vld [vmem:[#allocation10 + $0x48] sm:$0xf]
    %v1439 = vld [vmem:[#allocation10 + $0x4c] sm:$0xf]
    %v1440 = vld [vmem:[#allocation10 + $0x50] sm:$0xf]
    %v1441 = vld [vmem:[#allocation10 + $0x54] sm:$0xf]
    %v1442 = vld [vmem:[#allocation10 + $0x58] sm:$0xf]
    %v1443 = vld [vmem:[#allocation10 + $0x5c] sm:$0xf]
    %v1444 = vld [vmem:[#allocation10 + $0x60] sm:$0xf]
    %v1445 = vld [vmem:[#allocation10 + $0x64] sm:$0xf]
    %v1446 = vld [vmem:[#allocation10 + $0x68] sm:$0xf]
    %v1447 = vld [vmem:[#allocation10 + $0x6c] sm:$0xf]
    %v1448 = vld [vmem:[#allocation10 + $0x70] sm:$0xf]
    %v1449 = vld [vmem:[#allocation10 + $0x74] sm:$0xf]
    %v1450 = vld [vmem:[#allocation10 + $0x78] sm:$0xf]
    %v1451 = vld [vmem:[#allocation10 + $0x7c] sm:$0xf]
    %v1452 = vld [vmem:[#allocation10 + $0x80] sm:$0xf]
    %v1453 = vld [vmem:[#allocation10 + $0x84] sm:$0xf]
    %v1454 = vld [vmem:[#allocation10 + $0x88] sm:$0xf]
    %v1455 = vld [vmem:[#allocation10 + $0x8c] sm:$0xf]
    %v1456 = vld [vmem:[#allocation10 + $0x90] sm:$0xf]
    %v1457 = vld [vmem:[#allocation10 + $0x94] sm:$0xf]
    %v1458 = vld [vmem:[#allocation10 + $0x98] sm:$0xf]
    %v1459 = vld [vmem:[#allocation10 + $0x9c] sm:$0xf]
    %v1460 = vld [vmem:[#allocation10 + $0xa0] sm:$0xf]
    %v1461 = vld [vmem:[#allocation10 + $0xa4] sm:$0xf]
    %v1462 = vld [vmem:[#allocation10 + $0xa8] sm:$0xf]
    %v1463 = vld [vmem:[#allocation10 + $0xac] sm:$0xf]
    %v1464 = vld [vmem:[#allocation10 + $0xb0] sm:$0xf]
    %v1465 = vld [vmem:[#allocation10 + $0xb4] sm:$0xf]
    %v1466 = vld [vmem:[#allocation10 + $0xb8] sm:$0xf]
    %v1467 = vld [vmem:[#allocation10 + $0xbc] sm:$0xf]
    %v1468 = vld [vmem:[#allocation10 + $0xc0] sm:$0xf]
    %v1469 = vld [vmem:[#allocation10 + $0xc4] sm:$0xf]
    %v1470 = vld [vmem:[#allocation10 + $0xc8] sm:$0xf]
    %v1471 = vld [vmem:[#allocation10 + $0xcc] sm:$0xf]
    %v1472 = vld [vmem:[#allocation10 + $0xd0] sm:$0xf]
    %v1473 = vld [vmem:[#allocation10 + $0xd4] sm:$0xf]
    %v1474 = vld [vmem:[#allocation10 + $0xd8] sm:$0xf]
    %v1475 = vld [vmem:[#allocation10 + $0xdc] sm:$0xf]
    %v1476 = vld [vmem:[#allocation10 + $0xe0] sm:$0xf]
    %v1477 = vld [vmem:[#allocation10 + $0xe4] sm:$0xf]
    %v1478 = vld [vmem:[#allocation10 + $0xe8] sm:$0xf]
    %v1479 = vld [vmem:[#allocation10 + $0xec] sm:$0xf]
    %v1480 = vld [vmem:[#allocation10 + $0xf0] sm:$0xf]
    %v1481 = vld [vmem:[#allocation10 + $0xf4] sm:$0xf]
    %v1482 = vld [vmem:[#allocation10 + $0xf8] sm:$0xf]
    %v1483 = vld [vmem:[#allocation10 + $0xfc] sm:$0xf]
    %v1484 = vld [vmem:[%s6] sm:$0x1]
    %v1486 = vlaneseq
    %v1487 = vshrl.u32 %v1486, 7
    %v1488 = vsub.s32 0, %v1487
    %v1489 = vrot.slane %v1484, %v1488
    %v1555 = vunpack.c.l.b16 %v1420
    %v1556 = vunpack.c.l.b16 %v1421
    %v1557 = vunpack.c.l.b16 %v1422
    %v1558 = vunpack.c.l.b16 %v1423
    %v1559 = vunpack.c.l.b16 %v1424
    %v1560 = vunpack.c.l.b16 %v1425
    %v1561 = vunpack.c.l.b16 %v1426
    %v1562 = vunpack.c.l.b16 %v1427
    %v1563 = vunpack.c.l.b16 %v1428
    %v1564 = vunpack.c.l.b16 %v1429
    %v1565 = vunpack.c.l.b16 %v1430
    %v1566 = vunpack.c.l.b16 %v1431
    %v1567 = vunpack.c.l.b16 %v1432
    %v1568 = vunpack.c.l.b16 %v1433
    %v1569 = vunpack.c.l.b16 %v1434
    %v1570 = vunpack.c.l.b16 %v1435
    %v1571 = vunpack.c.l.b16 %v1436
    %v1572 = vunpack.c.l.b16 %v1437
    %v1573 = vunpack.c.l.b16 %v1438
    %v1574 = vunpack.c.l.b16 %v1439
    %v1575 = vunpack.c.l.b16 %v1440
    %v1576 = vunpack.c.l.b16 %v1441
    %v1577 = vunpack.c.l.b16 %v1442
    %v1578 = vunpack.c.l.b16 %v1443
    %v1579 = vunpack.c.l.b16 %v1444
    %v1580 = vunpack.c.l.b16 %v1445
    %v1581 = vunpack.c.l.b16 %v1446
    %v1582 = vunpack.c.l.b16 %v1447
    %v1583 = vunpack.c.l.b16 %v1448
    %v1584 = vunpack.c.l.b16 %v1449
    %v1585 = vunpack.c.l.b16 %v1450
    %v1586 = vunpack.c.l.b16 %v1451
    %v1587 = vunpack.c.l.b16 %v1452
    %v1588 = vunpack.c.l.b16 %v1453
    %v1589 = vunpack.c.l.b16 %v1454
    %v1590 = vunpack.c.l.b16 %v1455
    %v1591 = vunpack.c.l.b16 %v1456
    %v1592 = vunpack.c.l.b16 %v1457
    %v1593 = vunpack.c.l.b16 %v1458
    %v1594 = vunpack.c.l.b16 %v1459
    %v1595 = vunpack.c.l.b16 %v1460
    %v1596 = vunpack.c.l.b16 %v1461
    %v1597 = vunpack.c.l.b16 %v1462
    %v1598 = vunpack.c.l.b16 %v1463
    %v1599 = vunpack.c.l.b16 %v1464
    %v1600 = vunpack.c.l.b16 %v1465
    %v1601 = vunpack.c.l.b16 %v1466
    %v1602 = vunpack.c.l.b16 %v1467
    %v1603 = vunpack.c.l.b16 %v1468
    %v1604 = vunpack.c.l.b16 %v1469
    %v1605 = vunpack.c.l.b16 %v1470
    %v1606 = vunpack.c.l.b16 %v1471
    %v1607 = vunpack.c.l.b16 %v1472
    %v1608 = vunpack.c.l.b16 %v1473
    %v1609 = vunpack.c.l.b16 %v1474
    %v1610 = vunpack.c.l.b16 %v1475
    %v1611 = vunpack.c.l.b16 %v1476
    %v1612 = vunpack.c.l.b16 %v1477
    %v1613 = vunpack.c.l.b16 %v1478
    %v1614 = vunpack.c.l.b16 %v1479
    %v1615 = vunpack.c.l.b16 %v1480
    %v1616 = vunpack.c.l.b16 %v1481
    %v1617 = vunpack.c.l.b16 %v1482
    %v1618 = vunpack.c.l.b16 %v1483
    %v1619 = vpack.c.b16 %v1556, %v1555
    %v1620 = vpack.c.b16 %v1558, %v1557
    %v1621 = vpack.c.b16 %v1560, %v1559
    %v1622 = vpack.c.b16 %v1562, %v1561
    %v1623 = vpack.c.b16 %v1564, %v1563
    %v1624 = vpack.c.b16 %v1566, %v1565
    %v1625 = vpack.c.b16 %v1568, %v1567
    %v1626 = vpack.c.b16 %v1570, %v1569
    %v1627 = vpack.c.b16 %v1572, %v1571
    %v1628 = vpack.c.b16 %v1574, %v1573
    %v1629 = vpack.c.b16 %v1576, %v1575
    %v1630 = vpack.c.b16 %v1578, %v1577
    %v1631 = vpack.c.b16 %v1580, %v1579
    %v1632 = vpack.c.b16 %v1582, %v1581
    %v1633 = vpack.c.b16 %v1584, %v1583
    %v1634 = vpack.c.b16 %v1586, %v1585
    %v1635 = vpack.c.b16 %v1588, %v1587
    %v1636 = vpack.c.b16 %v1590, %v1589
    %v1637 = vpack.c.b16 %v1592, %v1591
    %v1638 = vpack.c.b16 %v1594, %v1593
    %v1639 = vpack.c.b16 %v1596, %v1595
    %v1640 = vpack.c.b16 %v1598, %v1597
    %v1641 = vpack.c.b16 %v1600, %v1599
    %v1642 = vpack.c.b16 %v1602, %v1601
    %v1643 = vpack.c.b16 %v1604, %v1603
    %v1644 = vpack.c.b16 %v1606, %v1605
    %v1645 = vpack.c.b16 %v1608, %v1607
    %v1646 = vpack.c.b16 %v1610, %v1609
    %v1647 = vpack.c.b16 %v1612, %v1611
    %v1648 = vpack.c.b16 %v1614, %v1613
    %v1649 = vpack.c.b16 %v1616, %v1615
    %v1650 = vpack.c.b16 %v1618, %v1617
    %1683 = vmatprep.subr.bf16.mxu0 0
    %1684 = vmatpush1.bf16.msra.mxu0 %v1626
    %1685 = vmatprep.subr.bf16.mxu0 0
    %1686 = vmatpush1.bf16.msra.mxu0 %v1625
    %1687 = vmatprep.subr.bf16.mxu0 0
    %1688 = vmatpush1.bf16.msra.mxu0 %v1624
    %1689 = vmatprep.subr.bf16.mxu0 0
    %1690 = vmatpush1.bf16.msra.mxu0 %v1623
    %1691 = vmatprep.subr.bf16.mxu0 0
    %1692 = vmatpush1.bf16.msra.mxu0 %v1622
    %1693 = vmatprep.subr.bf16.mxu0 0
    %1694 = vmatpush1.bf16.msra.mxu0 %v1621
    %1695 = vmatprep.subr.bf16.mxu0 0
    %1696 = vmatpush1.bf16.msra.mxu0 %v1620
    %1697 = vmatprep.subr.bf16.mxu0 0
    %1698 = vmatpush1.bf16.msra.mxu0 %v1619
    %1699 = vmatprep.subr.bf16.mxu0 0
    %1700 = vmatpush2.bf16.msra.mxu0 %v1634
    %1701 = vmatprep.subr.bf16.mxu0 0
    %1702 = vmatpush2.bf16.msra.mxu0 %v1633
    %1703 = vmatprep.subr.bf16.mxu0 0
    %1704 = vmatpush2.bf16.msra.mxu0 %v1632
    %1705 = vmatprep.subr.bf16.mxu0 0
    %1706 = vmatpush2.bf16.msra.mxu0 %v1631
    %1707 = vmatprep.subr.bf16.mxu0 0
    %1708 = vmatpush2.bf16.msra.mxu0 %v1630
    %1709 = vmatprep.subr.bf16.mxu0 0
    %1710 = vmatpush2.bf16.msra.mxu0 %v1629
    %1711 = vmatprep.subr.bf16.mxu0 0
    %1712 = vmatpush2.bf16.msra.mxu0 %v1628
    %1713 = vmatprep.subr.bf16.mxu0 0
    %1714 = vmatpush2.bf16.msra.mxu0 %v1627
    %1715 = vmatprep.mubr.bf16.mxu0 %v1417
    %1716 = vmatmul.mubr.bf16.gmra.mxu0 %v1416
    %v1717 = vpop.f32.mrf.mxu0
    %v1718 = vadd.f32 %v1489, %v1717
    %v1719 = vpop.f32.mrf.mxu0
    %v1720 = vpop.f32.mrf.mxu0
    %v1721 = vadd.f32 %v1489, %v1720
    %v1722 = vpop.f32.mrf.mxu0
    %1723 = vdwg.mxu0
    %1724 = vmatprep.subr.bf16.mxu0 0
    %1725 = vmatpush1.bf16.msra.mxu0 %v1642
    %1726 = vmatprep.subr.bf16.mxu0 0
    %1727 = vmatpush1.bf16.msra.mxu0 %v1641
    %1728 = vmatprep.subr.bf16.mxu0 0
    %1729 = vmatpush1.bf16.msra.mxu0 %v1640
    %1730 = vmatprep.subr.bf16.mxu0 0
    %1731 = vmatpush1.bf16.msra.mxu0 %v1639
    %1732 = vmatprep.subr.bf16.mxu0 0
    %1733 = vmatpush1.bf16.msra.mxu0 %v1638
    %1734 = vmatprep.subr.bf16.mxu0 0
    %1735 = vmatpush1.bf16.msra.mxu0 %v1637
    %1736 = vmatprep.subr.bf16.mxu0 0
    %1737 = vmatpush1.bf16.msra.mxu0 %v1636
    %1738 = vmatprep.subr.bf16.mxu0 0
    %1739 = vmatpush1.bf16.msra.mxu0 %v1635
    %1740 = vmatprep.subr.bf16.mxu0 0
    %1741 = vmatpush2.bf16.msra.mxu0 %v1650
    %1742 = vmatprep.subr.bf16.mxu0 0
    %1743 = vmatpush2.bf16.msra.mxu0 %v1649
    %1744 = vmatprep.subr.bf16.mxu0 0
    %1745 = vmatpush2.bf16.msra.mxu0 %v1648
    %1746 = vmatprep.subr.bf16.mxu0 0
    %1747 = vmatpush2.bf16.msra.mxu0 %v1647
    %1748 = vmatprep.subr.bf16.mxu0 0
    %1749 = vmatpush2.bf16.msra.mxu0 %v1646
    %1750 = vmatprep.subr.bf16.mxu0 0
    %1751 = vmatpush2.bf16.msra.mxu0 %v1645
    %1752 = vmatprep.subr.bf16.mxu0 0
    %1753 = vmatpush2.bf16.msra.mxu0 %v1644
    %1754 = vmatprep.subr.bf16.mxu0 0
    %1755 = vmatpush2.bf16.msra.mxu0 %v1643
    %1756 = vmatprep.mubr.bf16.mxu0 %v1419
    %1757 = vmatmul.mubr.bf16.gmra.mxu0 %v1418
    %v1758 = vpop.f32.mrf.mxu0
    %v1759 = vadd.f32 %v1718, %v1758
    %v1760 = vpop.f32.mrf.mxu0
    %v1761 = vpop.f32.mrf.mxu0
    %v1762 = vadd.f32 %v1721, %v1761
    %v1763 = vpop.f32.mrf.mxu0
    %1764 = vdwg.mxu0
    %v1765 = vtanh.pop %v1759
    %v1766 = vtanh.pop %v1762
    %1767 = vst [vmem:[#allocation11] sm:$0xff] %v1765
    %1768 = vst [vmem:[#allocation11 + $0x8] sm:$0xff] %v1766
    // Predicated region
    $region50: #{tpu_custom_call.1} parent=1 // pred_check
      _
    $region51: #{tpu_custom_call.1} parent=1 // pred_check_branch
      %1770 = sbr.rel (0) target = $region53
    $region52: #{tpu_custom_call.1} parent=1 // pred_region
      %s1772 = ssub.s32 256, 256
      %1773 = vsyncadd [#allocation4], %s1772
      %s1774 = sshll.u32 [#allocation11], 4
      %s1775 = int_to_ptr.vmem [resolvable:$true] %s1774
      %1780 = dma.vmem_to_hbm [thread:$0]  %s1775, 256, %s7, [#allocation4], 128, 128, 8
    $region53: #{tpu_custom_call.1} parent=1 // pred_fallthru
      _
    // Predicated region
    $region54: #{tpu_custom_call.1} parent=1 // pred_check
      _
    $region55: #{tpu_custom_call.1} parent=1 // pred_check_branch
      %1782 = sbr.rel (0) target = $region57
    $region56: #{tpu_custom_call.1} parent=1 // pred_region
      %1783 = dma.done [#allocation4], 256
    $region57: #{tpu_custom_call.1} parent=1 // pred_fallthru
      _
    %1784 = vsyncpa [#allocation3], 1
    %1785 = vsyncpa [#allocation6], 1
    %1786 = vsyncpa [#allocation9], 1
    %1787 = vsyncpa [#allocation4], 1

</llo_original>
